<compile_context>
chip_gen: v7x
topology: tpu7x:2x2x1
jax: 0.10.0
libtpu: 0.0.40
codegen_flags: <defaults>
</compile_context>

<pallas_src>
import functools

import numpy as np
import jax
import jax.numpy as jnp
from jax import lax
from jax.experimental import pallas as pl
from jax.experimental.pallas import tpu as pltpu


def typechain_kernel(x2_ref, m2_ref, wih_ref, whh_ref, bg_ref, wd_ref, bd_ref,
                     out_ref, *, T, B):
    # x2_ref:  (T*B, 2H)  row s*B+b = [x(t=s, b) | x(t=T-1-s, b)]
    # m2_ref:  (T*B, 2H)  f32 mask: cols 0:H -> (s < len[b]), cols H:2H -> (T-1-s < len[b])
    # wih_ref: (2H, 8H)   block-diag input->gate weights, gate-major cols [i|i|f|f|g|g|o|o]
    # whh_ref: (2H, 8H)   block-diag hidden->gate weights, same layout
    # bg_ref:  (1, 8H)    packed gate bias (b_ih + b_hh), same layout
    # wd_ref:  (1, 2H)    hidden2tag margin weights [W[1]-W[0]] ([fwd | bwd])
    # bd_ref:  (1, T)     hidden2tag margin bias (b[1]-b[0]) replicated over time
    # out_ref: (B, T)     int32 tag in natural (batch, time) layout
    H2 = x2_ref.shape[-1]
    H = H2 // 2

    x2 = x2_ref[...]                                           # (T*B, 2H)
    m2_full = m2_ref[...] > 0.5                                # mask built once
    whh = whh_ref[...]                                         # (2H, 8H), loaded once

    # Hoisted fused input projection: one lane-dense (T*B,2H)@(2H,8H) MXU matmul
    # covering both directions and all gates, bias folded in.
    xg = jnp.dot(x2, wih_ref[...], preferred_element_type=jnp.float32) + bg_ref[...]

    # Hoisted broadcasts (JAX does not CSE broadcast_in_dim inside the loop).
    wd2 = jnp.broadcast_to(wd_ref[...], (B, H2))               # (B, 2H)
    lane_t = lax.broadcasted_iota(jnp.int32, (1, T), 1)        # (1, T) = 0..T-1

    h2 = jnp.zeros((B, H2), jnp.float32)                       # [h_fwd | h_bwd]
    c2 = jnp.zeros((B, H2), jnp.float32)
    acc = jnp.zeros((B, T), jnp.float32)                       # margin accumulator

    for s in range(T):                                         # fully unrolled, T static
        lo = s * B
        # ONE fused MXU push per step: both directions, all gates -> (B, 8H).
        pre = xg[lo:lo + B, :] + jnp.dot(h2, whh, preferred_element_type=jnp.float32)
        th = jnp.tanh(pre)                                     # single EUP pass per step
        # i/f/o columns were pre-scaled by 0.5 -> sigmoid(x) == 0.5*tanh(0.5x)+0.5.
        i2 = th[:, 0:2 * H] * 0.5 + 0.5                        # (B, 2H) [fwd | bwd]
        f2 = th[:, 2 * H:4 * H] * 0.5 + 0.5
        g2 = th[:, 4 * H:6 * H]
        o2 = th[:, 6 * H:8 * H] * 0.5 + 0.5
        c2_new = f2 * c2 + i2 * g2
        h2_new = o2 * jnp.tanh(c2_new)

        m2 = m2_full[lo:lo + B, :]                             # (B, 2H) step mask
        h2 = jnp.where(m2, h2_new, h2)                         # freeze state past seq end
        c2 = jnp.where(m2, c2_new, c2)

        # Folded 2-class head (off the recurrent critical path): per-step margin
        # contributions via VPU multiply + lane reduce, scattered into time lanes.
        prod = h2 * wd2                                        # (B, 2H)
        mf = jnp.sum(prod[:, :H], axis=-1, keepdims=True)      # fwd half -> time s
        mb = jnp.sum(prod[:, H:], axis=-1, keepdims=True)      # bwd half -> time T-1-s
        acc = (acc
               + mf * (lane_t == s).astype(jnp.float32)
               + mb * (lane_t == (T - 1 - s)).astype(jnp.float32))

    margin = acc + bd_ref[...]                                 # (B, T)
    # torch.max returns the FIRST max index on ties -> class 1 only if strictly greater.
    out_ref[...] = jnp.where(margin > 0.0, 1, 0).astype(jnp.int32)


def typechain_forward(word_inputs, lengths, mask, packed_params):
    """word_inputs: (B, T, H) batch-first f32, lengths: (B,), mask: (B, T)."""
    wih, whh, bg, wd, bd_scalar = packed_params
    B, T, H = word_inputs.shape

    # Per-step fused input: row s*B+b = [x(t=s, b) | x(t=T-1-s, b)].
    x_tm = jnp.transpose(word_inputs, (1, 0, 2))               # (T, B, H)
    x2 = jnp.concatenate([x_tm, x_tm[::-1]], axis=-1).reshape(T * B, 2 * H)

    # Lane-dense step mask: cols 0:H fwd-valid at t=s, cols H:2H bwd-valid at t=T-1-s.
    valid = (jnp.arange(T, dtype=jnp.int32)[:, None]
             < lengths.astype(jnp.int32)[None, :])             # (T, B)
    m2 = jnp.concatenate(
        [jnp.broadcast_to(valid[:, :, None], (T, B, H)),
         jnp.broadcast_to(valid[::-1][:, :, None], (T, B, H))],
        axis=-1).astype(jnp.float32).reshape(T * B, 2 * H)

    bd_row = jnp.full((1, T), bd_scalar, jnp.float32)

    kern = functools.partial(typechain_kernel, T=T, B=B)
    tag_nat = pl.pallas_call(
        kern,
        out_shape=jax.ShapeDtypeStruct((B, T), jnp.int32),
        grid=(1,),
        in_specs=[
            pl.BlockSpec((T * B, 2 * H), lambda i: (0, 0)),
            pl.BlockSpec((T * B, 2 * H), lambda i: (0, 0)),
            pl.BlockSpec((2 * H, 8 * H), lambda i: (0, 0)),
            pl.BlockSpec((2 * H, 8 * H), lambda i: (0, 0)),
            pl.BlockSpec((1, 8 * H), lambda i: (0, 0)),
            pl.BlockSpec((1, 2 * H), lambda i: (0, 0)),
            pl.BlockSpec((1, T), lambda i: (0, 0)),
        ],
        out_specs=pl.BlockSpec((B, T), lambda i: (0, 0)),
        compiler_params=pltpu.CompilerParams(dimension_semantics=("arbitrary",)),
    )(x2, m2, wih, whh, bg, wd, bd_row)

    # Reproduce the module's `outs.view(B*T,-1)` on a time-major (T,B,2) tensor
    # + argmax + `.view(B,T)`: flatten in (t,b) order, then reshape to (B, T).
    tag_bt = jnp.transpose(tag_nat).reshape(B, T)
    return mask.astype(jnp.int32) * tag_bt


# ------------------------- parameters (deterministic) -------------------------
def make_params(key, H):
    bound = 1.0 / np.sqrt(H)
    keys = jax.random.split(key, 10)

    def u(k_, shape):
        return jax.random.uniform(k_, shape, jnp.float32,
                                  minval=-bound, maxval=bound)

    p = {
        "w_ih": [u(keys[0], (4 * H, H)), u(keys[1], (4 * H, H))],   # [fwd, bwd]
        "w_hh": [u(keys[2], (4 * H, H)), u(keys[3], (4 * H, H))],
        "b_ih": [u(keys[4], (4 * H,)), u(keys[5], (4 * H,))],
        "b_hh": [u(keys[6], (4 * H,)), u(keys[7], (4 * H,))],
        "w_lin": u(keys[8], (2, 2 * H)),                            # hidden2tag_sl_1
        "b_lin": u(keys[9], (2,)),
    }
    return p


def pack_params(p, H):
    # Fused block-diagonal layouts, gate-major columns:
    #   column block (2*q + d)*H : (2*q + d + 1)*H  = gate q in [i,f,g,o], direction d.
    #   rows 0:H act on the fwd stream (x(t) / h_fwd), rows H:2H on the bwd stream.
    # i/f/o columns (and their bias) are pre-scaled by 0.5 so the kernel's single
    # tanh over the pre-activation yields sigmoid via 0.5*tanh + 0.5 (exact scaling).
    H2, H8 = 2 * H, 8 * H
    wih = np.zeros((H2, H8), np.float32)
    whh = np.zeros((H2, H8), np.float32)
    bg = np.zeros((1, H8), np.float32)
    for q in range(4):
        scale = 1.0 if q == 2 else 0.5                     # g gate unscaled
        for d in range(2):
            c0 = (2 * q + d) * H
            wih[d * H:(d + 1) * H, c0:c0 + H] = \
                scale * np.asarray(p["w_ih"][d])[q * H:(q + 1) * H, :].T
            whh[d * H:(d + 1) * H, c0:c0 + H] = \
                scale * np.asarray(p["w_hh"][d])[q * H:(q + 1) * H, :].T
            bg[0, c0:c0 + H] = scale * (
                np.asarray(p["b_ih"][d])[q * H:(q + 1) * H]
                + np.asarray(p["b_hh"][d])[q * H:(q + 1) * H])
    wlin = np.asarray(p["w_lin"])                          # (2, 2H) = [fwd H | bwd H]
    wd = (wlin[1] - wlin[0]).reshape(1, 2 * H).astype(np.float32)
    blin = np.asarray(p["b_lin"])
    bd = float(blin[1] - blin[0])
    return (jnp.asarray(wih), jnp.asarray(whh), jnp.asarray(bg),
            jnp.asarray(wd), bd)


# ------------------------------ pure-numpy reference ------------------------------
def typechain_reference(x, lengths, mask, p):
    x = np.asarray(x, np.float32)
    lengths = np.asarray(lengths)
    mask = np.asarray(mask)
    B, T, H = x.shape

    def sigmoid(z):
        return 1.0 / (1.0 + np.exp(-z))

    def run_dir(d, reverse):
        wih = np.asarray(p["w_ih"][d])
        whh = np.asarray(p["w_hh"][d])
        bias = np.asarray(p["b_ih"][d]) + np.asarray(p["b_hh"][d])
        h = np.zeros((B, H), np.float32)
        c = np.zeros((B, H), np.float32)
        out = np.zeros((B, T, H), np.float32)
        ts = range(T - 1, -1, -1) if reverse else range(T)
        for t in ts:
            gates = x[:, t] @ wih.T + h @ whh.T + bias
            i = sigmoid(gates[:, :H])
            f = sigmoid(gates[:, H:2 * H])
            g = np.tanh(gates[:, 2 * H:3 * H])
            o = sigmoid(gates[:, 3 * H:])
            c_new = f * c + i * g
            h_new = o * np.tanh(c_new)
            act = (t < lengths)[:, None]
            h = np.where(act, h_new, h)
            c = np.where(act, c_new, c)
            out[:, t] = np.where(act, h_new, 0.0)
        return out

    fwd = run_dir(0, False)
    bwd = run_dir(1, True)
    lstm_out = np.concatenate([fwd, bwd], axis=-1).transpose(1, 0, 2)   # (T, B, 2H)
    outs = lstm_out @ np.asarray(p["w_lin"]).T + np.asarray(p["b_lin"]) # (T, B, 2)
    tag = np.argmax(outs.reshape(B * T, 2), axis=1).reshape(B, T)
    return mask.astype(np.int64) * tag


if __name__ == "__main__":
    B, T, H = 2, 8, 32                         # batch, seq_len, lstm_hidden
    key = jax.random.PRNGKey(0)
    kx, kp = jax.random.split(key)

    word_inputs = jax.random.normal(kx, (B, T, H), jnp.float32)
    word_seq_lengths = jnp.array([8, 5], dtype=jnp.int32)   # sorted descending, max == T
    mask = (jnp.arange(T)[None, :] < word_seq_lengths[:, None]).astype(jnp.int32)

    params = make_params(kp, H)
    packed = pack_params(params, H)

    tag_seq = typechain_forward(word_inputs, word_seq_lengths, mask, packed)
    tag_seq = jax.block_until_ready(tag_seq)

    ref = typechain_reference(word_inputs, word_seq_lengths, mask, params)
    assert np.array_equal(np.asarray(tag_seq).astype(np.int64), ref.astype(np.int64)), \
        (np.asarray(tag_seq), ref)
    print("KERNEL_OK")
</pallas_src>

<mosaic_0001>
module attributes {stable_mosaic.version = 11 : i64} {
  func.func @typechain_kernel(%arg0: i32, %arg1: memref<16x64xf32, #tpu.memory_space<vmem>>, %arg2: memref<16x64xf32, #tpu.memory_space<vmem>>, %arg3: memref<64x256xf32, #tpu.memory_space<vmem>>, %arg4: memref<64x256xf32, #tpu.memory_space<vmem>>, %arg5: memref<1x256xf32, #tpu.memory_space<vmem>>, %arg6: memref<1x64xf32, #tpu.memory_space<vmem>>, %arg7: memref<1x8xf32, #tpu.memory_space<vmem>>, %arg8: memref<2x8xi32, #tpu.memory_space<vmem>>) attributes {dimension_semantics = [#tpu.dimension_semantics<arbitrary>], iteration_bounds = array<i64: 1>, scalar_prefetch = 0 : i64, scratch_operands = 0 : i64, tpu.core_type = #tpu.core_type<tc>, window_params = [{pipeline_mode = #tpu.pipeline_mode<synchronous>, transform_indices = @transform_0, window_bounds = array<i64: 16, 64>}, {pipeline_mode = #tpu.pipeline_mode<synchronous>, transform_indices = @transform_1, window_bounds = array<i64: 16, 64>}, {pipeline_mode = #tpu.pipeline_mode<synchronous>, transform_indices = @transform_2, window_bounds = array<i64: 64, 256>}, {pipeline_mode = #tpu.pipeline_mode<synchronous>, transform_indices = @transform_3, window_bounds = array<i64: 64, 256>}, {pipeline_mode = #tpu.pipeline_mode<synchronous>, transform_indices = @transform_4, window_bounds = array<i64: 1, 256>}, {pipeline_mode = #tpu.pipeline_mode<synchronous>, transform_indices = @transform_5, window_bounds = array<i64: 1, 64>}, {pipeline_mode = #tpu.pipeline_mode<synchronous>, transform_indices = @transform_6, window_bounds = array<i64: 1, 8>}, {pipeline_mode = #tpu.pipeline_mode<synchronous>, transform_indices = @transform_7, window_bounds = array<i64: 2, 8>}]} {
    %c0 = arith.constant 0 : index
    %c0_0 = arith.constant 0 : index
    %0 = vector.load %arg1[%c0, %c0_0] : memref<16x64xf32, #tpu.memory_space<vmem>>, vector<16x64xf32>
    %c0_1 = arith.constant 0 : index
    %c0_2 = arith.constant 0 : index
    %1 = vector.load %arg2[%c0_1, %c0_2] : memref<16x64xf32, #tpu.memory_space<vmem>>, vector<16x64xf32>
    %cst = arith.constant 5.000000e-01 : f32
    %2 = vector.broadcast %cst : f32 to vector<16x64xf32>
    %3 = arith.cmpf ogt, %1, %2 : vector<16x64xf32>
    %c0_3 = arith.constant 0 : index
    %c0_4 = arith.constant 0 : index
    %4 = vector.load %arg4[%c0_3, %c0_4] : memref<64x256xf32, #tpu.memory_space<vmem>>, vector<64x256xf32>
    %c0_5 = arith.constant 0 : index
    %c0_6 = arith.constant 0 : index
    %5 = vector.load %arg3[%c0_5, %c0_6] : memref<64x256xf32, #tpu.memory_space<vmem>>, vector<64x256xf32>
    %cst_7 = arith.constant dense<0.000000e+00> : vector<16x256xf32>
    %6 = tpu.matmul %0, %5, %cst_7 {dimension_numbers = #tpu.dot_dimension_numbers<[1], [0], [0], [1], [0, 0, 1, 1], [], []>} : vector<16x64xf32>, vector<64x256xf32>, vector<16x256xf32> -> vector<16x256xf32>
    %c0_8 = arith.constant 0 : index
    %c0_9 = arith.constant 0 : index
    %7 = vector.load %arg5[%c0_8, %c0_9] : memref<1x256xf32, #tpu.memory_space<vmem>>, vector<1x256xf32>
    %8 = vector.broadcast %7 : vector<1x256xf32> to vector<16x256xf32>
    %9 = arith.addf %6, %8 : vector<16x256xf32>
    %c0_10 = arith.constant 0 : index
    %c0_11 = arith.constant 0 : index
    %10 = vector.load %arg6[%c0_10, %c0_11] : memref<1x64xf32, #tpu.memory_space<vmem>>, vector<1x64xf32>
    %11 = vector.shape_cast %10 : vector<1x64xf32> to vector<1x64xf32>
    %12 = vector.broadcast %11 : vector<1x64xf32> to vector<2x64xf32>
    %13 = tpu.iota {dimensions = array<i32: 1>} : vector<1x8xi32>
    %cst_12 = arith.constant 0.000000e+00 : f32
    %14 = vector.broadcast %cst_12 : f32 to vector<2x64xf32>
    %cst_13 = arith.constant 0.000000e+00 : f32
    %15 = vector.broadcast %cst_13 : f32 to vector<2x64xf32>
    %cst_14 = arith.constant 0.000000e+00 : f32
    %16 = vector.broadcast %cst_14 : f32 to vector<2x8xf32>
    %17 = vector.extract_strided_slice %9 {offsets = [0, 0], sizes = [2, 256], strides = [1, 1]} : vector<16x256xf32> to vector<2x256xf32>
    %cst_15 = arith.constant dense<0.000000e+00> : vector<2x256xf32>
    %18 = tpu.matmul %14, %4, %cst_15 {dimension_numbers = #tpu.dot_dimension_numbers<[1], [0], [0], [1], [0, 0, 1, 1], [], []>} : vector<2x64xf32>, vector<64x256xf32>, vector<2x256xf32> -> vector<2x256xf32>
    %19 = arith.addf %17, %18 : vector<2x256xf32>
    %20 = math.tanh %19 : vector<2x256xf32>
    %21 = vector.extract_strided_slice %20 {offsets = [0, 0], sizes = [2, 64], strides = [1, 1]} : vector<2x256xf32> to vector<2x64xf32>
    %cst_16 = arith.constant 5.000000e-01 : f32
    %22 = vector.broadcast %cst_16 : f32 to vector<2x64xf32>
    %23 = arith.mulf %21, %22 : vector<2x64xf32>
    %cst_17 = arith.constant 5.000000e-01 : f32
    %24 = vector.broadcast %cst_17 : f32 to vector<2x64xf32>
    %25 = arith.addf %23, %24 : vector<2x64xf32>
    %26 = vector.extract_strided_slice %20 {offsets = [0, 64], sizes = [2, 64], strides = [1, 1]} : vector<2x256xf32> to vector<2x64xf32>
    %cst_18 = arith.constant 5.000000e-01 : f32
    %27 = vector.broadcast %cst_18 : f32 to vector<2x64xf32>
    %28 = arith.mulf %26, %27 : vector<2x64xf32>
    %cst_19 = arith.constant 5.000000e-01 : f32
    %29 = vector.broadcast %cst_19 : f32 to vector<2x64xf32>
    %30 = arith.addf %28, %29 : vector<2x64xf32>
    %31 = vector.extract_strided_slice %20 {offsets = [0, 128], sizes = [2, 64], strides = [1, 1]} : vector<2x256xf32> to vector<2x64xf32>
    %32 = vector.extract_strided_slice %20 {offsets = [0, 192], sizes = [2, 64], strides = [1, 1]} : vector<2x256xf32> to vector<2x64xf32>
    %cst_20 = arith.constant 5.000000e-01 : f32
    %33 = vector.broadcast %cst_20 : f32 to vector<2x64xf32>
    %34 = arith.mulf %32, %33 : vector<2x64xf32>
    %cst_21 = arith.constant 5.000000e-01 : f32
    %35 = vector.broadcast %cst_21 : f32 to vector<2x64xf32>
    %36 = arith.addf %34, %35 : vector<2x64xf32>
    %37 = arith.mulf %30, %15 : vector<2x64xf32>
    %38 = arith.mulf %25, %31 : vector<2x64xf32>
    %39 = arith.addf %37, %38 : vector<2x64xf32>
    %40 = math.tanh %39 : vector<2x64xf32>
    %41 = arith.mulf %36, %40 : vector<2x64xf32>
    %42 = vector.extract_strided_slice %3 {offsets = [0, 0], sizes = [2, 64], strides = [1, 1]} : vector<16x64xi1> to vector<2x64xi1>
    %43 = arith.select %42, %41, %14 : vector<2x64xi1>, vector<2x64xf32>
    %44 = arith.select %42, %39, %15 : vector<2x64xi1>, vector<2x64xf32>
    %45 = arith.mulf %43, %12 : vector<2x64xf32>
    %46 = vector.extract_strided_slice %45 {offsets = [0, 0], sizes = [2, 32], strides = [1, 1]} : vector<2x64xf32> to vector<2x32xf32>
    %cst_22 = arith.constant dense<0.000000e+00> : vector<2xf32>
    %47 = vector.multi_reduction <add>, %46, %cst_22 [1] : vector<2x32xf32> to vector<2xf32>
    %48 = vector.shape_cast %47 : vector<2xf32> to vector<2x1xf32>
    %49 = vector.extract_strided_slice %45 {offsets = [0, 32], sizes = [2, 32], strides = [1, 1]} : vector<2x64xf32> to vector<2x32xf32>
    %cst_23 = arith.constant dense<0.000000e+00> : vector<2xf32>
    %50 = vector.multi_reduction <add>, %49, %cst_23 [1] : vector<2x32xf32> to vector<2xf32>
    %51 = vector.shape_cast %50 : vector<2xf32> to vector<2x1xf32>
    %c0_i32 = arith.constant 0 : i32
    %52 = vector.broadcast %c0_i32 : i32 to vector<1x8xi32>
    %53 = arith.cmpi eq, %13, %52 : vector<1x8xi32>
    %54 = arith.extui %53 : vector<1x8xi1> to vector<1x8xi32>
    %55 = arith.sitofp %54 : vector<1x8xi32> to vector<1x8xf32>
    %56 = vector.broadcast %48 : vector<2x1xf32> to vector<2x8xf32>
    %57 = vector.broadcast %55 : vector<1x8xf32> to vector<2x8xf32>
    %58 = arith.mulf %56, %57 : vector<2x8xf32>
    %59 = arith.addf %16, %58 : vector<2x8xf32>
    %c7_i32 = arith.constant 7 : i32
    %60 = vector.broadcast %c7_i32 : i32 to vector<1x8xi32>
    %61 = arith.cmpi eq, %13, %60 : vector<1x8xi32>
    %62 = arith.extui %61 : vector<1x8xi1> to vector<1x8xi32>
    %63 = arith.sitofp %62 : vector<1x8xi32> to vector<1x8xf32>
    %64 = vector.broadcast %51 : vector<2x1xf32> to vector<2x8xf32>
    %65 = vector.broadcast %63 : vector<1x8xf32> to vector<2x8xf32>
    %66 = arith.mulf %64, %65 : vector<2x8xf32>
    %67 = arith.addf %59, %66 : vector<2x8xf32>
    %68 = vector.extract_strided_slice %9 {offsets = [2, 0], sizes = [2, 256], strides = [1, 1]} : vector<16x256xf32> to vector<2x256xf32>
    %cst_24 = arith.constant dense<0.000000e+00> : vector<2x256xf32>
    %69 = tpu.matmul %43, %4, %cst_24 {dimension_numbers = #tpu.dot_dimension_numbers<[1], [0], [0], [1], [0, 0, 1, 1], [], []>} : vector<2x64xf32>, vector<64x256xf32>, vector<2x256xf32> -> vector<2x256xf32>
    %70 = arith.addf %68, %69 : vector<2x256xf32>
    %71 = math.tanh %70 : vector<2x256xf32>
    %72 = vector.extract_strided_slice %71 {offsets = [0, 0], sizes = [2, 64], strides = [1, 1]} : vector<2x256xf32> to vector<2x64xf32>
    %cst_25 = arith.constant 5.000000e-01 : f32
    %73 = vector.broadcast %cst_25 : f32 to vector<2x64xf32>
    %74 = arith.mulf %72, %73 : vector<2x64xf32>
    %cst_26 = arith.constant 5.000000e-01 : f32
    %75 = vector.broadcast %cst_26 : f32 to vector<2x64xf32>
    %76 = arith.addf %74, %75 : vector<2x64xf32>
    %77 = vector.extract_strided_slice %71 {offsets = [0, 64], sizes = [2, 64], strides = [1, 1]} : vector<2x256xf32> to vector<2x64xf32>
    %cst_27 = arith.constant 5.000000e-01 : f32
    %78 = vector.broadcast %cst_27 : f32 to vector<2x64xf32>
    %79 = arith.mulf %77, %78 : vector<2x64xf32>
    %cst_28 = arith.constant 5.000000e-01 : f32
    %80 = vector.broadcast %cst_28 : f32 to vector<2x64xf32>
    %81 = arith.addf %79, %80 : vector<2x64xf32>
    %82 = vector.extract_strided_slice %71 {offsets = [0, 128], sizes = [2, 64], strides = [1, 1]} : vector<2x256xf32> to vector<2x64xf32>
    %83 = vector.extract_strided_slice %71 {offsets = [0, 192], sizes = [2, 64], strides = [1, 1]} : vector<2x256xf32> to vector<2x64xf32>
    %cst_29 = arith.constant 5.000000e-01 : f32
    %84 = vector.broadcast %cst_29 : f32 to vector<2x64xf32>
    %85 = arith.mulf %83, %84 : vector<2x64xf32>
    %cst_30 = arith.constant 5.000000e-01 : f32
    %86 = vector.broadcast %cst_30 : f32 to vector<2x64xf32>
    %87 = arith.addf %85, %86 : vector<2x64xf32>
    %88 = arith.mulf %81, %44 : vector<2x64xf32>
    %89 = arith.mulf %76, %82 : vector<2x64xf32>
    %90 = arith.addf %88, %89 : vector<2x64xf32>
    %91 = math.tanh %90 : vector<2x64xf32>
    %92 = arith.mulf %87, %91 : vector<2x64xf32>
    %93 = vector.extract_strided_slice %3 {offsets = [2, 0], sizes = [2, 64], strides = [1, 1]} : vector<16x64xi1> to vector<2x64xi1>
    %94 = arith.select %93, %92, %43 : vector<2x64xi1>, vector<2x64xf32>
    %95 = arith.select %93, %90, %44 : vector<2x64xi1>, vector<2x64xf32>
    %96 = arith.mulf %94, %12 : vector<2x64xf32>
    %97 = vector.extract_strided_slice %96 {offsets = [0, 0], sizes = [2, 32], strides = [1, 1]} : vector<2x64xf32> to vector<2x32xf32>
    %cst_31 = arith.constant dense<0.000000e+00> : vector<2xf32>
    %98 = vector.multi_reduction <add>, %97, %cst_31 [1] : vector<2x32xf32> to vector<2xf32>
    %99 = vector.shape_cast %98 : vector<2xf32> to vector<2x1xf32>
    %100 = vector.extract_strided_slice %96 {offsets = [0, 32], sizes = [2, 32], strides = [1, 1]} : vector<2x64xf32> to vector<2x32xf32>
    %cst_32 = arith.constant dense<0.000000e+00> : vector<2xf32>
    %101 = vector.multi_reduction <add>, %100, %cst_32 [1] : vector<2x32xf32> to vector<2xf32>
    %102 = vector.shape_cast %101 : vector<2xf32> to vector<2x1xf32>
    %c1_i32 = arith.constant 1 : i32
    %103 = vector.broadcast %c1_i32 : i32 to vector<1x8xi32>
    %104 = arith.cmpi eq, %13, %103 : vector<1x8xi32>
    %105 = arith.extui %104 : vector<1x8xi1> to vector<1x8xi32>
    %106 = arith.sitofp %105 : vector<1x8xi32> to vector<1x8xf32>
    %107 = vector.broadcast %99 : vector<2x1xf32> to vector<2x8xf32>
    %108 = vector.broadcast %106 : vector<1x8xf32> to vector<2x8xf32>
    %109 = arith.mulf %107, %108 : vector<2x8xf32>
    %110 = arith.addf %67, %109 : vector<2x8xf32>
    %c6_i32 = arith.constant 6 : i32
    %111 = vector.broadcast %c6_i32 : i32 to vector<1x8xi32>
    %112 = arith.cmpi eq, %13, %111 : vector<1x8xi32>
    %113 = arith.extui %112 : vector<1x8xi1> to vector<1x8xi32>
    %114 = arith.sitofp %113 : vector<1x8xi32> to vector<1x8xf32>
    %115 = vector.broadcast %102 : vector<2x1xf32> to vector<2x8xf32>
    %116 = vector.broadcast %114 : vector<1x8xf32> to vector<2x8xf32>
    %117 = arith.mulf %115, %116 : vector<2x8xf32>
    %118 = arith.addf %110, %117 : vector<2x8xf32>
    %119 = vector.extract_strided_slice %9 {offsets = [4, 0], sizes = [2, 256], strides = [1, 1]} : vector<16x256xf32> to vector<2x256xf32>
    %cst_33 = arith.constant dense<0.000000e+00> : vector<2x256xf32>
    %120 = tpu.matmul %94, %4, %cst_33 {dimension_numbers = #tpu.dot_dimension_numbers<[1], [0], [0], [1], [0, 0, 1, 1], [], []>} : vector<2x64xf32>, vector<64x256xf32>, vector<2x256xf32> -> vector<2x256xf32>
    %121 = arith.addf %119, %120 : vector<2x256xf32>
    %122 = math.tanh %121 : vector<2x256xf32>
    %123 = vector.extract_strided_slice %122 {offsets = [0, 0], sizes = [2, 64], strides = [1, 1]} : vector<2x256xf32> to vector<2x64xf32>
    %cst_34 = arith.constant 5.000000e-01 : f32
    %124 = vector.broadcast %cst_34 : f32 to vector<2x64xf32>
    %125 = arith.mulf %123, %124 : vector<2x64xf32>
    %cst_35 = arith.constant 5.000000e-01 : f32
    %126 = vector.broadcast %cst_35 : f32 to vector<2x64xf32>
    %127 = arith.addf %125, %126 : vector<2x64xf32>
    %128 = vector.extract_strided_slice %122 {offsets = [0, 64], sizes = [2, 64], strides = [1, 1]} : vector<2x256xf32> to vector<2x64xf32>
    %cst_36 = arith.constant 5.000000e-01 : f32
    %129 = vector.broadcast %cst_36 : f32 to vector<2x64xf32>
    %130 = arith.mulf %128, %129 : vector<2x64xf32>
    %cst_37 = arith.constant 5.000000e-01 : f32
    %131 = vector.broadcast %cst_37 : f32 to vector<2x64xf32>
    %132 = arith.addf %130, %131 : vector<2x64xf32>
    %133 = vector.extract_strided_slice %122 {offsets = [0, 128], sizes = [2, 64], strides = [1, 1]} : vector<2x256xf32> to vector<2x64xf32>
    %134 = vector.extract_strided_slice %122 {offsets = [0, 192], sizes = [2, 64], strides = [1, 1]} : vector<2x256xf32> to vector<2x64xf32>
    %cst_38 = arith.constant 5.000000e-01 : f32
    %135 = vector.broadcast %cst_38 : f32 to vector<2x64xf32>
    %136 = arith.mulf %134, %135 : vector<2x64xf32>
    %cst_39 = arith.constant 5.000000e-01 : f32
    %137 = vector.broadcast %cst_39 : f32 to vector<2x64xf32>
    %138 = arith.addf %136, %137 : vector<2x64xf32>
    %139 = arith.mulf %132, %95 : vector<2x64xf32>
    %140 = arith.mulf %127, %133 : vector<2x64xf32>
    %141 = arith.addf %139, %140 : vector<2x64xf32>
    %142 = math.tanh %141 : vector<2x64xf32>
    %143 = arith.mulf %138, %142 : vector<2x64xf32>
    %144 = vector.extract_strided_slice %3 {offsets = [4, 0], sizes = [2, 64], strides = [1, 1]} : vector<16x64xi1> to vector<2x64xi1>
    %145 = arith.select %144, %143, %94 : vector<2x64xi1>, vector<2x64xf32>
    %146 = arith.select %144, %141, %95 : vector<2x64xi1>, vector<2x64xf32>
    %147 = arith.mulf %145, %12 : vector<2x64xf32>
    %148 = vector.extract_strided_slice %147 {offsets = [0, 0], sizes = [2, 32], strides = [1, 1]} : vector<2x64xf32> to vector<2x32xf32>
    %cst_40 = arith.constant dense<0.000000e+00> : vector<2xf32>
    %149 = vector.multi_reduction <add>, %148, %cst_40 [1] : vector<2x32xf32> to vector<2xf32>
    %150 = vector.shape_cast %149 : vector<2xf32> to vector<2x1xf32>
    %151 = vector.extract_strided_slice %147 {offsets = [0, 32], sizes = [2, 32], strides = [1, 1]} : vector<2x64xf32> to vector<2x32xf32>
    %cst_41 = arith.constant dense<0.000000e+00> : vector<2xf32>
    %152 = vector.multi_reduction <add>, %151, %cst_41 [1] : vector<2x32xf32> to vector<2xf32>
    %153 = vector.shape_cast %152 : vector<2xf32> to vector<2x1xf32>
    %c2_i32 = arith.constant 2 : i32
    %154 = vector.broadcast %c2_i32 : i32 to vector<1x8xi32>
    %155 = arith.cmpi eq, %13, %154 : vector<1x8xi32>
    %156 = arith.extui %155 : vector<1x8xi1> to vector<1x8xi32>
    %157 = arith.sitofp %156 : vector<1x8xi32> to vector<1x8xf32>
    %158 = vector.broadcast %150 : vector<2x1xf32> to vector<2x8xf32>
    %159 = vector.broadcast %157 : vector<1x8xf32> to vector<2x8xf32>
    %160 = arith.mulf %158, %159 : vector<2x8xf32>
    %161 = arith.addf %118, %160 : vector<2x8xf32>
    %c5_i32 = arith.constant 5 : i32
    %162 = vector.broadcast %c5_i32 : i32 to vector<1x8xi32>
    %163 = arith.cmpi eq, %13, %162 : vector<1x8xi32>
    %164 = arith.extui %163 : vector<1x8xi1> to vector<1x8xi32>
    %165 = arith.sitofp %164 : vector<1x8xi32> to vector<1x8xf32>
    %166 = vector.broadcast %153 : vector<2x1xf32> to vector<2x8xf32>
    %167 = vector.broadcast %165 : vector<1x8xf32> to vector<2x8xf32>
    %168 = arith.mulf %166, %167 : vector<2x8xf32>
    %169 = arith.addf %161, %168 : vector<2x8xf32>
    %170 = vector.extract_strided_slice %9 {offsets = [6, 0], sizes = [2, 256], strides = [1, 1]} : vector<16x256xf32> to vector<2x256xf32>
    %cst_42 = arith.constant dense<0.000000e+00> : vector<2x256xf32>
    %171 = tpu.matmul %145, %4, %cst_42 {dimension_numbers = #tpu.dot_dimension_numbers<[1], [0], [0], [1], [0, 0, 1, 1], [], []>} : vector<2x64xf32>, vector<64x256xf32>, vector<2x256xf32> -> vector<2x256xf32>
    %172 = arith.addf %170, %171 : vector<2x256xf32>
    %173 = math.tanh %172 : vector<2x256xf32>
    %174 = vector.extract_strided_slice %173 {offsets = [0, 0], sizes = [2, 64], strides = [1, 1]} : vector<2x256xf32> to vector<2x64xf32>
    %cst_43 = arith.constant 5.000000e-01 : f32
    %175 = vector.broadcast %cst_43 : f32 to vector<2x64xf32>
    %176 = arith.mulf %174, %175 : vector<2x64xf32>
    %cst_44 = arith.constant 5.000000e-01 : f32
    %177 = vector.broadcast %cst_44 : f32 to vector<2x64xf32>
    %178 = arith.addf %176, %177 : vector<2x64xf32>
    %179 = vector.extract_strided_slice %173 {offsets = [0, 64], sizes = [2, 64], strides = [1, 1]} : vector<2x256xf32> to vector<2x64xf32>
    %cst_45 = arith.constant 5.000000e-01 : f32
    %180 = vector.broadcast %cst_45 : f32 to vector<2x64xf32>
    %181 = arith.mulf %179, %180 : vector<2x64xf32>
    %cst_46 = arith.constant 5.000000e-01 : f32
    %182 = vector.broadcast %cst_46 : f32 to vector<2x64xf32>
    %183 = arith.addf %181, %182 : vector<2x64xf32>
    %184 = vector.extract_strided_slice %173 {offsets = [0, 128], sizes = [2, 64], strides = [1, 1]} : vector<2x256xf32> to vector<2x64xf32>
    %185 = vector.extract_strided_slice %173 {offsets = [0, 192], sizes = [2, 64], strides = [1, 1]} : vector<2x256xf32> to vector<2x64xf32>
    %cst_47 = arith.constant 5.000000e-01 : f32
    %186 = vector.broadcast %cst_47 : f32 to vector<2x64xf32>
    %187 = arith.mulf %185, %186 : vector<2x64xf32>
    %cst_48 = arith.constant 5.000000e-01 : f32
    %188 = vector.broadcast %cst_48 : f32 to vector<2x64xf32>
    %189 = arith.addf %187, %188 : vector<2x64xf32>
    %190 = arith.mulf %183, %146 : vector<2x64xf32>
    %191 = arith.mulf %178, %184 : vector<2x64xf32>
    %192 = arith.addf %190, %191 : vector<2x64xf32>
    %193 = math.tanh %192 : vector<2x64xf32>
    %194 = arith.mulf %189, %193 : vector<2x64xf32>
    %195 = vector.extract_strided_slice %3 {offsets = [6, 0], sizes = [2, 64], strides = [1, 1]} : vector<16x64xi1> to vector<2x64xi1>
    %196 = arith.select %195, %194, %145 : vector<2x64xi1>, vector<2x64xf32>
    %197 = arith.select %195, %192, %146 : vector<2x64xi1>, vector<2x64xf32>
    %198 = arith.mulf %196, %12 : vector<2x64xf32>
    %199 = vector.extract_strided_slice %198 {offsets = [0, 0], sizes = [2, 32], strides = [1, 1]} : vector<2x64xf32> to vector<2x32xf32>
    %cst_49 = arith.constant dense<0.000000e+00> : vector<2xf32>
    %200 = vector.multi_reduction <add>, %199, %cst_49 [1] : vector<2x32xf32> to vector<2xf32>
    %201 = vector.shape_cast %200 : vector<2xf32> to vector<2x1xf32>
    %202 = vector.extract_strided_slice %198 {offsets = [0, 32], sizes = [2, 32], strides = [1, 1]} : vector<2x64xf32> to vector<2x32xf32>
    %cst_50 = arith.constant dense<0.000000e+00> : vector<2xf32>
    %203 = vector.multi_reduction <add>, %202, %cst_50 [1] : vector<2x32xf32> to vector<2xf32>
    %204 = vector.shape_cast %203 : vector<2xf32> to vector<2x1xf32>
    %c3_i32 = arith.constant 3 : i32
    %205 = vector.broadcast %c3_i32 : i32 to vector<1x8xi32>
    %206 = arith.cmpi eq, %13, %205 : vector<1x8xi32>
    %207 = arith.extui %206 : vector<1x8xi1> to vector<1x8xi32>
    %208 = arith.sitofp %207 : vector<1x8xi32> to vector<1x8xf32>
    %209 = vector.broadcast %201 : vector<2x1xf32> to vector<2x8xf32>
    %210 = vector.broadcast %208 : vector<1x8xf32> to vector<2x8xf32>
    %211 = arith.mulf %209, %210 : vector<2x8xf32>
    %212 = arith.addf %169, %211 : vector<2x8xf32>
    %c4_i32 = arith.constant 4 : i32
    %213 = vector.broadcast %c4_i32 : i32 to vector<1x8xi32>
    %214 = arith.cmpi eq, %13, %213 : vector<1x8xi32>
    %215 = arith.extui %214 : vector<1x8xi1> to vector<1x8xi32>
    %216 = arith.sitofp %215 : vector<1x8xi32> to vector<1x8xf32>
    %217 = vector.broadcast %204 : vector<2x1xf32> to vector<2x8xf32>
    %218 = vector.broadcast %216 : vector<1x8xf32> to vector<2x8xf32>
    %219 = arith.mulf %217, %218 : vector<2x8xf32>
    %220 = arith.addf %212, %219 : vector<2x8xf32>
    %221 = vector.extract_strided_slice %9 {offsets = [8, 0], sizes = [2, 256], strides = [1, 1]} : vector<16x256xf32> to vector<2x256xf32>
    %cst_51 = arith.constant dense<0.000000e+00> : vector<2x256xf32>
    %222 = tpu.matmul %196, %4, %cst_51 {dimension_numbers = #tpu.dot_dimension_numbers<[1], [0], [0], [1], [0, 0, 1, 1], [], []>} : vector<2x64xf32>, vector<64x256xf32>, vector<2x256xf32> -> vector<2x256xf32>
    %223 = arith.addf %221, %222 : vector<2x256xf32>
    %224 = math.tanh %223 : vector<2x256xf32>
    %225 = vector.extract_strided_slice %224 {offsets = [0, 0], sizes = [2, 64], strides = [1, 1]} : vector<2x256xf32> to vector<2x64xf32>
    %cst_52 = arith.constant 5.000000e-01 : f32
    %226 = vector.broadcast %cst_52 : f32 to vector<2x64xf32>
    %227 = arith.mulf %225, %226 : vector<2x64xf32>
    %cst_53 = arith.constant 5.000000e-01 : f32
    %228 = vector.broadcast %cst_53 : f32 to vector<2x64xf32>
    %229 = arith.addf %227, %228 : vector<2x64xf32>
    %230 = vector.extract_strided_slice %224 {offsets = [0, 64], sizes = [2, 64], strides = [1, 1]} : vector<2x256xf32> to vector<2x64xf32>
    %cst_54 = arith.constant 5.000000e-01 : f32
    %231 = vector.broadcast %cst_54 : f32 to vector<2x64xf32>
    %232 = arith.mulf %230, %231 : vector<2x64xf32>
    %cst_55 = arith.constant 5.000000e-01 : f32
    %233 = vector.broadcast %cst_55 : f32 to vector<2x64xf32>
    %234 = arith.addf %232, %233 : vector<2x64xf32>
    %235 = vector.extract_strided_slice %224 {offsets = [0, 128], sizes = [2, 64], strides = [1, 1]} : vector<2x256xf32> to vector<2x64xf32>
    %236 = vector.extract_strided_slice %224 {offsets = [0, 192], sizes = [2, 64], strides = [1, 1]} : vector<2x256xf32> to vector<2x64xf32>
    %cst_56 = arith.constant 5.000000e-01 : f32
    %237 = vector.broadcast %cst_56 : f32 to vector<2x64xf32>
    %238 = arith.mulf %236, %237 : vector<2x64xf32>
    %cst_57 = arith.constant 5.000000e-01 : f32
    %239 = vector.broadcast %cst_57 : f32 to vector<2x64xf32>
    %240 = arith.addf %238, %239 : vector<2x64xf32>
    %241 = arith.mulf %234, %197 : vector<2x64xf32>
    %242 = arith.mulf %229, %235 : vector<2x64xf32>
    %243 = arith.addf %241, %242 : vector<2x64xf32>
    %244 = math.tanh %243 : vector<2x64xf32>
    %245 = arith.mulf %240, %244 : vector<2x64xf32>
    %246 = vector.extract_strided_slice %3 {offsets = [8, 0], sizes = [2, 64], strides = [1, 1]} : vector<16x64xi1> to vector<2x64xi1>
    %247 = arith.select %246, %245, %196 : vector<2x64xi1>, vector<2x64xf32>
    %248 = arith.select %246, %243, %197 : vector<2x64xi1>, vector<2x64xf32>
    %249 = arith.mulf %247, %12 : vector<2x64xf32>
    %250 = vector.extract_strided_slice %249 {offsets = [0, 0], sizes = [2, 32], strides = [1, 1]} : vector<2x64xf32> to vector<2x32xf32>
    %cst_58 = arith.constant dense<0.000000e+00> : vector<2xf32>
    %251 = vector.multi_reduction <add>, %250, %cst_58 [1] : vector<2x32xf32> to vector<2xf32>
    %252 = vector.shape_cast %251 : vector<2xf32> to vector<2x1xf32>
    %253 = vector.extract_strided_slice %249 {offsets = [0, 32], sizes = [2, 32], strides = [1, 1]} : vector<2x64xf32> to vector<2x32xf32>
    %cst_59 = arith.constant dense<0.000000e+00> : vector<2xf32>
    %254 = vector.multi_reduction <add>, %253, %cst_59 [1] : vector<2x32xf32> to vector<2xf32>
    %255 = vector.shape_cast %254 : vector<2xf32> to vector<2x1xf32>
    %c4_i32_60 = arith.constant 4 : i32
    %256 = vector.broadcast %c4_i32_60 : i32 to vector<1x8xi32>
    %257 = arith.cmpi eq, %13, %256 : vector<1x8xi32>
    %258 = arith.extui %257 : vector<1x8xi1> to vector<1x8xi32>
    %259 = arith.sitofp %258 : vector<1x8xi32> to vector<1x8xf32>
    %260 = vector.broadcast %252 : vector<2x1xf32> to vector<2x8xf32>
    %261 = vector.broadcast %259 : vector<1x8xf32> to vector<2x8xf32>
    %262 = arith.mulf %260, %261 : vector<2x8xf32>
    %263 = arith.addf %220, %262 : vector<2x8xf32>
    %c3_i32_61 = arith.constant 3 : i32
    %264 = vector.broadcast %c3_i32_61 : i32 to vector<1x8xi32>
    %265 = arith.cmpi eq, %13, %264 : vector<1x8xi32>
    %266 = arith.extui %265 : vector<1x8xi1> to vector<1x8xi32>
    %267 = arith.sitofp %266 : vector<1x8xi32> to vector<1x8xf32>
    %268 = vector.broadcast %255 : vector<2x1xf32> to vector<2x8xf32>
    %269 = vector.broadcast %267 : vector<1x8xf32> to vector<2x8xf32>
    %270 = arith.mulf %268, %269 : vector<2x8xf32>
    %271 = arith.addf %263, %270 : vector<2x8xf32>
    %272 = vector.extract_strided_slice %9 {offsets = [10, 0], sizes = [2, 256], strides = [1, 1]} : vector<16x256xf32> to vector<2x256xf32>
    %cst_62 = arith.constant dense<0.000000e+00> : vector<2x256xf32>
    %273 = tpu.matmul %247, %4, %cst_62 {dimension_numbers = #tpu.dot_dimension_numbers<[1], [0], [0], [1], [0, 0, 1, 1], [], []>} : vector<2x64xf32>, vector<64x256xf32>, vector<2x256xf32> -> vector<2x256xf32>
    %274 = arith.addf %272, %273 : vector<2x256xf32>
    %275 = math.tanh %274 : vector<2x256xf32>
    %276 = vector.extract_strided_slice %275 {offsets = [0, 0], sizes = [2, 64], strides = [1, 1]} : vector<2x256xf32> to vector<2x64xf32>
    %cst_63 = arith.constant 5.000000e-01 : f32
    %277 = vector.broadcast %cst_63 : f32 to vector<2x64xf32>
    %278 = arith.mulf %276, %277 : vector<2x64xf32>
    %cst_64 = arith.constant 5.000000e-01 : f32
    %279 = vector.broadcast %cst_64 : f32 to vector<2x64xf32>
    %280 = arith.addf %278, %279 : vector<2x64xf32>
    %281 = vector.extract_strided_slice %275 {offsets = [0, 64], sizes = [2, 64], strides = [1, 1]} : vector<2x256xf32> to vector<2x64xf32>
    %cst_65 = arith.constant 5.000000e-01 : f32
    %282 = vector.broadcast %cst_65 : f32 to vector<2x64xf32>
    %283 = arith.mulf %281, %282 : vector<2x64xf32>
    %cst_66 = arith.constant 5.000000e-01 : f32
    %284 = vector.broadcast %cst_66 : f32 to vector<2x64xf32>
    %285 = arith.addf %283, %284 : vector<2x64xf32>
    %286 = vector.extract_strided_slice %275 {offsets = [0, 128], sizes = [2, 64], strides = [1, 1]} : vector<2x256xf32> to vector<2x64xf32>
    %287 = vector.extract_strided_slice %275 {offsets = [0, 192], sizes = [2, 64], strides = [1, 1]} : vector<2x256xf32> to vector<2x64xf32>
    %cst_67 = arith.constant 5.000000e-01 : f32
    %288 = vector.broadcast %cst_67 : f32 to vector<2x64xf32>
    %289 = arith.mulf %287, %288 : vector<2x64xf32>
    %cst_68 = arith.constant 5.000000e-01 : f32
    %290 = vector.broadcast %cst_68 : f32 to vector<2x64xf32>
    %291 = arith.addf %289, %290 : vector<2x64xf32>
    %292 = arith.mulf %285, %248 : vector<2x64xf32>
    %293 = arith.mulf %280, %286 : vector<2x64xf32>
    %294 = arith.addf %292, %293 : vector<2x64xf32>
    %295 = math.tanh %294 : vector<2x64xf32>
    %296 = arith.mulf %291, %295 : vector<2x64xf32>
    %297 = vector.extract_strided_slice %3 {offsets = [10, 0], sizes = [2, 64], strides = [1, 1]} : vector<16x64xi1> to vector<2x64xi1>
    %298 = arith.select %297, %296, %247 : vector<2x64xi1>, vector<2x64xf32>
    %299 = arith.select %297, %294, %248 : vector<2x64xi1>, vector<2x64xf32>
    %300 = arith.mulf %298, %12 : vector<2x64xf32>
    %301 = vector.extract_strided_slice %300 {offsets = [0, 0], sizes = [2, 32], strides = [1, 1]} : vector<2x64xf32> to vector<2x32xf32>
    %cst_69 = arith.constant dense<0.000000e+00> : vector<2xf32>
    %302 = vector.multi_reduction <add>, %301, %cst_69 [1] : vector<2x32xf32> to vector<2xf32>
    %303 = vector.shape_cast %302 : vector<2xf32> to vector<2x1xf32>
    %304 = vector.extract_strided_slice %300 {offsets = [0, 32], sizes = [2, 32], strides = [1, 1]} : vector<2x64xf32> to vector<2x32xf32>
    %cst_70 = arith.constant dense<0.000000e+00> : vector<2xf32>
    %305 = vector.multi_reduction <add>, %304, %cst_70 [1] : vector<2x32xf32> to vector<2xf32>
    %306 = vector.shape_cast %305 : vector<2xf32> to vector<2x1xf32>
    %c5_i32_71 = arith.constant 5 : i32
    %307 = vector.broadcast %c5_i32_71 : i32 to vector<1x8xi32>
    %308 = arith.cmpi eq, %13, %307 : vector<1x8xi32>
    %309 = arith.extui %308 : vector<1x8xi1> to vector<1x8xi32>
    %310 = arith.sitofp %309 : vector<1x8xi32> to vector<1x8xf32>
    %311 = vector.broadcast %303 : vector<2x1xf32> to vector<2x8xf32>
    %312 = vector.broadcast %310 : vector<1x8xf32> to vector<2x8xf32>
    %313 = arith.mulf %311, %312 : vector<2x8xf32>
    %314 = arith.addf %271, %313 : vector<2x8xf32>
    %c2_i32_72 = arith.constant 2 : i32
    %315 = vector.broadcast %c2_i32_72 : i32 to vector<1x8xi32>
    %316 = arith.cmpi eq, %13, %315 : vector<1x8xi32>
    %317 = arith.extui %316 : vector<1x8xi1> to vector<1x8xi32>
    %318 = arith.sitofp %317 : vector<1x8xi32> to vector<1x8xf32>
    %319 = vector.broadcast %306 : vector<2x1xf32> to vector<2x8xf32>
    %320 = vector.broadcast %318 : vector<1x8xf32> to vector<2x8xf32>
    %321 = arith.mulf %319, %320 : vector<2x8xf32>
    %322 = arith.addf %314, %321 : vector<2x8xf32>
    %323 = vector.extract_strided_slice %9 {offsets = [12, 0], sizes = [2, 256], strides = [1, 1]} : vector<16x256xf32> to vector<2x256xf32>
    %cst_73 = arith.constant dense<0.000000e+00> : vector<2x256xf32>
    %324 = tpu.matmul %298, %4, %cst_73 {dimension_numbers = #tpu.dot_dimension_numbers<[1], [0], [0], [1], [0, 0, 1, 1], [], []>} : vector<2x64xf32>, vector<64x256xf32>, vector<2x256xf32> -> vector<2x256xf32>
    %325 = arith.addf %323, %324 : vector<2x256xf32>
    %326 = math.tanh %325 : vector<2x256xf32>
    %327 = vector.extract_strided_slice %326 {offsets = [0, 0], sizes = [2, 64], strides = [1, 1]} : vector<2x256xf32> to vector<2x64xf32>
    %cst_74 = arith.constant 5.000000e-01 : f32
    %328 = vector.broadcast %cst_74 : f32 to vector<2x64xf32>
    %329 = arith.mulf %327, %328 : vector<2x64xf32>
    %cst_75 = arith.constant 5.000000e-01 : f32
    %330 = vector.broadcast %cst_75 : f32 to vector<2x64xf32>
    %331 = arith.addf %329, %330 : vector<2x64xf32>
    %332 = vector.extract_strided_slice %326 {offsets = [0, 64], sizes = [2, 64], strides = [1, 1]} : vector<2x256xf32> to vector<2x64xf32>
    %cst_76 = arith.constant 5.000000e-01 : f32
    %333 = vector.broadcast %cst_76 : f32 to vector<2x64xf32>
    %334 = arith.mulf %332, %333 : vector<2x64xf32>
    %cst_77 = arith.constant 5.000000e-01 : f32
    %335 = vector.broadcast %cst_77 : f32 to vector<2x64xf32>
    %336 = arith.addf %334, %335 : vector<2x64xf32>
    %337 = vector.extract_strided_slice %326 {offsets = [0, 128], sizes = [2, 64], strides = [1, 1]} : vector<2x256xf32> to vector<2x64xf32>
    %338 = vector.extract_strided_slice %326 {offsets = [0, 192], sizes = [2, 64], strides = [1, 1]} : vector<2x256xf32> to vector<2x64xf32>
    %cst_78 = arith.constant 5.000000e-01 : f32
    %339 = vector.broadcast %cst_78 : f32 to vector<2x64xf32>
    %340 = arith.mulf %338, %339 : vector<2x64xf32>
    %cst_79 = arith.constant 5.000000e-01 : f32
    %341 = vector.broadcast %cst_79 : f32 to vector<2x64xf32>
    %342 = arith.addf %340, %341 : vector<2x64xf32>
    %343 = arith.mulf %336, %299 : vector<2x64xf32>
    %344 = arith.mulf %331, %337 : vector<2x64xf32>
    %345 = arith.addf %343, %344 : vector<2x64xf32>
    %346 = math.tanh %345 : vector<2x64xf32>
    %347 = arith.mulf %342, %346 : vector<2x64xf32>
    %348 = vector.extract_strided_slice %3 {offsets = [12, 0], sizes = [2, 64], strides = [1, 1]} : vector<16x64xi1> to vector<2x64xi1>
    %349 = arith.select %348, %347, %298 : vector<2x64xi1>, vector<2x64xf32>
    %350 = arith.select %348, %345, %299 : vector<2x64xi1>, vector<2x64xf32>
    %351 = arith.mulf %349, %12 : vector<2x64xf32>
    %352 = vector.extract_strided_slice %351 {offsets = [0, 0], sizes = [2, 32], strides = [1, 1]} : vector<2x64xf32> to vector<2x32xf32>
    %cst_80 = arith.constant dense<0.000000e+00> : vector<2xf32>
    %353 = vector.multi_reduction <add>, %352, %cst_80 [1] : vector<2x32xf32> to vector<2xf32>
    %354 = vector.shape_cast %353 : vector<2xf32> to vector<2x1xf32>
    %355 = vector.extract_strided_slice %351 {offsets = [0, 32], sizes = [2, 32], strides = [1, 1]} : vector<2x64xf32> to vector<2x32xf32>
    %cst_81 = arith.constant dense<0.000000e+00> : vector<2xf32>
    %356 = vector.multi_reduction <add>, %355, %cst_81 [1] : vector<2x32xf32> to vector<2xf32>
    %357 = vector.shape_cast %356 : vector<2xf32> to vector<2x1xf32>
    %c6_i32_82 = arith.constant 6 : i32
    %358 = vector.broadcast %c6_i32_82 : i32 to vector<1x8xi32>
    %359 = arith.cmpi eq, %13, %358 : vector<1x8xi32>
    %360 = arith.extui %359 : vector<1x8xi1> to vector<1x8xi32>
    %361 = arith.sitofp %360 : vector<1x8xi32> to vector<1x8xf32>
    %362 = vector.broadcast %354 : vector<2x1xf32> to vector<2x8xf32>
    %363 = vector.broadcast %361 : vector<1x8xf32> to vector<2x8xf32>
    %364 = arith.mulf %362, %363 : vector<2x8xf32>
    %365 = arith.addf %322, %364 : vector<2x8xf32>
    %c1_i32_83 = arith.constant 1 : i32
    %366 = vector.broadcast %c1_i32_83 : i32 to vector<1x8xi32>
    %367 = arith.cmpi eq, %13, %366 : vector<1x8xi32>
    %368 = arith.extui %367 : vector<1x8xi1> to vector<1x8xi32>
    %369 = arith.sitofp %368 : vector<1x8xi32> to vector<1x8xf32>
    %370 = vector.broadcast %357 : vector<2x1xf32> to vector<2x8xf32>
    %371 = vector.broadcast %369 : vector<1x8xf32> to vector<2x8xf32>
    %372 = arith.mulf %370, %371 : vector<2x8xf32>
    %373 = arith.addf %365, %372 : vector<2x8xf32>
    %374 = vector.extract_strided_slice %9 {offsets = [14, 0], sizes = [2, 256], strides = [1, 1]} : vector<16x256xf32> to vector<2x256xf32>
    %cst_84 = arith.constant dense<0.000000e+00> : vector<2x256xf32>
    %375 = tpu.matmul %349, %4, %cst_84 {dimension_numbers = #tpu.dot_dimension_numbers<[1], [0], [0], [1], [0, 0, 1, 1], [], []>} : vector<2x64xf32>, vector<64x256xf32>, vector<2x256xf32> -> vector<2x256xf32>
    %376 = arith.addf %374, %375 : vector<2x256xf32>
    %377 = math.tanh %376 : vector<2x256xf32>
    %378 = vector.extract_strided_slice %377 {offsets = [0, 0], sizes = [2, 64], strides = [1, 1]} : vector<2x256xf32> to vector<2x64xf32>
    %cst_85 = arith.constant 5.000000e-01 : f32
    %379 = vector.broadcast %cst_85 : f32 to vector<2x64xf32>
    %380 = arith.mulf %378, %379 : vector<2x64xf32>
    %cst_86 = arith.constant 5.000000e-01 : f32
    %381 = vector.broadcast %cst_86 : f32 to vector<2x64xf32>
    %382 = arith.addf %380, %381 : vector<2x64xf32>
    %383 = vector.extract_strided_slice %377 {offsets = [0, 64], sizes = [2, 64], strides = [1, 1]} : vector<2x256xf32> to vector<2x64xf32>
    %cst_87 = arith.constant 5.000000e-01 : f32
    %384 = vector.broadcast %cst_87 : f32 to vector<2x64xf32>
    %385 = arith.mulf %383, %384 : vector<2x64xf32>
    %cst_88 = arith.constant 5.000000e-01 : f32
    %386 = vector.broadcast %cst_88 : f32 to vector<2x64xf32>
    %387 = arith.addf %385, %386 : vector<2x64xf32>
    %388 = vector.extract_strided_slice %377 {offsets = [0, 128], sizes = [2, 64], strides = [1, 1]} : vector<2x256xf32> to vector<2x64xf32>
    %389 = vector.extract_strided_slice %377 {offsets = [0, 192], sizes = [2, 64], strides = [1, 1]} : vector<2x256xf32> to vector<2x64xf32>
    %cst_89 = arith.constant 5.000000e-01 : f32
    %390 = vector.broadcast %cst_89 : f32 to vector<2x64xf32>
    %391 = arith.mulf %389, %390 : vector<2x64xf32>
    %cst_90 = arith.constant 5.000000e-01 : f32
    %392 = vector.broadcast %cst_90 : f32 to vector<2x64xf32>
    %393 = arith.addf %391, %392 : vector<2x64xf32>
    %394 = arith.mulf %387, %350 : vector<2x64xf32>
    %395 = arith.mulf %382, %388 : vector<2x64xf32>
    %396 = arith.addf %394, %395 : vector<2x64xf32>
    %397 = math.tanh %396 : vector<2x64xf32>
    %398 = arith.mulf %393, %397 : vector<2x64xf32>
    %399 = vector.extract_strided_slice %3 {offsets = [14, 0], sizes = [2, 64], strides = [1, 1]} : vector<16x64xi1> to vector<2x64xi1>
    %400 = arith.select %399, %398, %349 : vector<2x64xi1>, vector<2x64xf32>
    %401 = arith.mulf %400, %12 : vector<2x64xf32>
    %402 = vector.extract_strided_slice %401 {offsets = [0, 0], sizes = [2, 32], strides = [1, 1]} : vector<2x64xf32> to vector<2x32xf32>
    %cst_91 = arith.constant dense<0.000000e+00> : vector<2xf32>
    %403 = vector.multi_reduction <add>, %402, %cst_91 [1] : vector<2x32xf32> to vector<2xf32>
    %404 = vector.shape_cast %403 : vector<2xf32> to vector<2x1xf32>
    %405 = vector.extract_strided_slice %401 {offsets = [0, 32], sizes = [2, 32], strides = [1, 1]} : vector<2x64xf32> to vector<2x32xf32>
    %cst_92 = arith.constant dense<0.000000e+00> : vector<2xf32>
    %406 = vector.multi_reduction <add>, %405, %cst_92 [1] : vector<2x32xf32> to vector<2xf32>
    %407 = vector.shape_cast %406 : vector<2xf32> to vector<2x1xf32>
    %c7_i32_93 = arith.constant 7 : i32
    %408 = vector.broadcast %c7_i32_93 : i32 to vector<1x8xi32>
    %409 = arith.cmpi eq, %13, %408 : vector<1x8xi32>
    %410 = arith.extui %409 : vector<1x8xi1> to vector<1x8xi32>
    %411 = arith.sitofp %410 : vector<1x8xi32> to vector<1x8xf32>
    %412 = vector.broadcast %404 : vector<2x1xf32> to vector<2x8xf32>
    %413 = vector.broadcast %411 : vector<1x8xf32> to vector<2x8xf32>
    %414 = arith.mulf %412, %413 : vector<2x8xf32>
    %415 = arith.addf %373, %414 : vector<2x8xf32>
    %c0_i32_94 = arith.constant 0 : i32
    %416 = vector.broadcast %c0_i32_94 : i32 to vector<1x8xi32>
    %417 = arith.cmpi eq, %13, %416 : vector<1x8xi32>
    %418 = arith.extui %417 : vector<1x8xi1> to vector<1x8xi32>
    %419 = arith.sitofp %418 : vector<1x8xi32> to vector<1x8xf32>
    %420 = vector.broadcast %407 : vector<2x1xf32> to vector<2x8xf32>
    %421 = vector.broadcast %419 : vector<1x8xf32> to vector<2x8xf32>
    %422 = arith.mulf %420, %421 : vector<2x8xf32>
    %423 = arith.addf %415, %422 : vector<2x8xf32>
    %c0_95 = arith.constant 0 : index
    %c0_96 = arith.constant 0 : index
    %424 = vector.load %arg7[%c0_95, %c0_96] : memref<1x8xf32, #tpu.memory_space<vmem>>, vector<1x8xf32>
    %425 = vector.broadcast %424 : vector<1x8xf32> to vector<2x8xf32>
    %426 = arith.addf %423, %425 : vector<2x8xf32>
    %cst_97 = arith.constant 0.000000e+00 : f32
    %427 = vector.broadcast %cst_97 : f32 to vector<2x8xf32>
    %428 = arith.cmpf ogt, %426, %427 : vector<2x8xf32>
    %c1_i32_98 = arith.constant 1 : i32
    %c0_i32_99 = arith.constant 0 : i32
    %429 = vector.broadcast %c1_i32_98 : i32 to vector<2x8xi32>
    %430 = vector.broadcast %c0_i32_99 : i32 to vector<2x8xi32>
    %431 = arith.select %428, %429, %430 : vector<2x8xi1>, vector<2x8xi32>
    %c0_100 = arith.constant 0 : index
    %c0_101 = arith.constant 0 : index
    %432 = vector.load %arg8[%c0_100, %c0_101] : memref<2x8xi32, #tpu.memory_space<vmem>>, vector<2x8xi32>
    tpu.vector_store %arg8[%c0_100, %c0_101], %431 {strides = array<i32>} : memref<2x8xi32, #tpu.memory_space<vmem>>, vector<2x8xi32>,
    return
  }
  func.func @transform_0(%arg0: i32) -> (i32, i32) {
    %c0_i32 = arith.constant 0 : i32
    %c0_i32_0 = arith.constant 0 : i32
    %c0_i32_1 = arith.constant 0 : i32
    return %c0_i32, %c0_i32_0 : i32, i32
  }
  func.func @transform_1(%arg0: i32) -> (i32, i32) {
    %c0_i32 = arith.constant 0 : i32
    %c0_i32_0 = arith.constant 0 : i32
    %c0_i32_1 = arith.constant 0 : i32
    return %c0_i32, %c0_i32_0 : i32, i32
  }
  func.func @transform_2(%arg0: i32) -> (i32, i32) {
    %c0_i32 = arith.constant 0 : i32
    %c0_i32_0 = arith.constant 0 : i32
    %c0_i32_1 = arith.constant 0 : i32
    return %c0_i32, %c0_i32_0 : i32, i32
  }
  func.func @transform_3(%arg0: i32) -> (i32, i32) {
    %c0_i32 = arith.constant 0 : i32
    %c0_i32_0 = arith.constant 0 : i32
    %c0_i32_1 = arith.constant 0 : i32
    return %c0_i32, %c0_i32_0 : i32, i32
  }
  func.func @transform_4(%arg0: i32) -> (i32, i32) {
    %c0_i32 = arith.constant 0 : i32
    %c0_i32_0 = arith.constant 0 : i32
    %c0_i32_1 = arith.constant 0 : i32
    return %c0_i32, %c0_i32_0 : i32, i32
  }
  func.func @transform_5(%arg0: i32) -> (i32, i32) {
    %c0_i32 = arith.constant 0 : i32
    %c0_i32_0 = arith.constant 0 : i32
    %c0_i32_1 = arith.constant 0 : i32
    return %c0_i32, %c0_i32_0 : i32, i32
  }
  func.func @transform_6(%arg0: i32) -> (i32, i32) {
    %c0_i32 = arith.constant 0 : i32
    %c0_i32_0 = arith.constant 0 : i32
    %c0_i32_1 = arith.constant 0 : i32
    return %c0_i32, %c0_i32_0 : i32, i32
  }
  func.func @transform_7(%arg0: i32) -> (i32, i32) {
    %c0_i32 = arith.constant 0 : i32
    %c0_i32_0 = arith.constant 0 : i32
    %c0_i32_1 = arith.constant 0 : i32
    return %c0_i32, %c0_i32_0 : i32, i32
  }
}

</mosaic_0001>

<llo_original>
// kernel: tpu_custom_call.1
$region0: #{tpu_custom_call.1}
  #allocation0 [shape = 'u32[]', space=smem, size = 0x4, offset = 0x4, fixed_abs, tag = 'smem constant byte address 0x4 - core index']
  #allocation1 [shape = 'u32[144,128]{1,0:T(1,128)}', space=vmem, size = 0x12000, scoped, tag = 'internal scratch']
  %s0 = inlined_call_operand.hbm [shape: f32[16,64], index: 0, kind: input, shape index: {}]
  %s1 = inlined_call_operand.hbm [shape: f32[16,64], index: 1, kind: input, shape index: {}]
  %s2 = inlined_call_operand.hbm [shape: f32[64,256], index: 2, kind: input, shape index: {}]
  %s3 = inlined_call_operand.hbm [shape: f32[64,256], index: 3, kind: input, shape index: {}]
  %s4 = inlined_call_operand.vmem [shape: f32[1,256], index: 4, kind: input, shape index: {}]
  %s5 = inlined_call_operand.vmem [shape: f32[1,64], index: 5, kind: input, shape index: {}]
  %s6 = inlined_call_operand.vmem [shape: f32[1,8], index: 6, kind: input, shape index: {}]
  %s7 = inlined_call_operand.hbm [shape: s32[2,8], index: 7, kind: output, shape index: {}]
  %s8 = sld [smem:[#allocation0]]
  $region54: #{tpu_custom_call.1} parent=0
    _
  %s10 = ssub.s32 1, %s8
  %s11 = scalar_select 0, %s10, %s8
  $region1: #{tpu_custom_call.1} parent=0
    #allocation2 [shape = 'u8[8192]{0}', space=vmem, size = 0x2000, scoped, tag = 'input window, operand 0, single buffered']
    #allocation3 [shape = 's32[1]{0}', space=sflag, size = 0x4, scoped, tag = 'scoped memory for tpu_custom_call.1']
    #allocation4 [shape = 's32[1]{0}', space=sflag, size = 0x4, scoped, tag = 'scoped memory for tpu_custom_call.1']
    #allocation5 [shape = 'u8[8192]{0}', space=vmem, size = 0x2000, scoped, tag = 'input window, operand 1, single buffered']
    #allocation6 [shape = 's32[1]{0}', space=sflag, size = 0x4, scoped, tag = 'scoped memory for tpu_custom_call.1']
    #allocation7 [shape = 'u8[65536]{0}', space=vmem, size = 0x10000, scoped, tag = 'input window, operand 2, single buffered']
    #allocation8 [shape = 'u8[65536]{0}', space=vmem, size = 0x10000, scoped, tag = 'input window, operand 3, single buffered']
    #allocation9 [shape = 's32[1]{0}', space=sflag, size = 0x4, scoped, tag = 'scoped memory for tpu_custom_call.1']
    #allocation10 [shape = 'u8[1024]{0}', space=vmem, size = 0x400, scoped, tag = 'output window, operand 0, single buffered']
    %12 = vsyncpa [#allocation3], 0
    %13 = vsyncpa [#allocation6], 0
    %14 = vsyncpa [#allocation9], 0
    %15 = vsyncpa [#allocation4], 0
    // Predicated region
    $region2: #{tpu_custom_call.1} parent=1 // pred_check
      _
    $region3: #{tpu_custom_call.1} parent=1 // pred_check_branch
      %17 = sbr.rel (0) target = $region5
    $region4: #{tpu_custom_call.1} parent=1 // pred_region
      %s19 = ssub.s32 256, 256
      %20 = vsyncadd [#allocation3], %s19
      %s21 = sshll.u32 [#allocation2], 4
      %s22 = int_to_ptr.vmem [resolvable:$true] %s21
      %27 = dma.hbm_to_vmem [thread:$0]  %s0, 256, %s22, [#allocation3], 128, 128, 8
    $region5: #{tpu_custom_call.1} parent=1 // pred_fallthru
      _
    // Predicated region
    $region6: #{tpu_custom_call.1} parent=1 // pred_check
      _
    $region7: #{tpu_custom_call.1} parent=1 // pred_check_branch
      %29 = sbr.rel (0) target = $region9
    $region8: #{tpu_custom_call.1} parent=1 // pred_region
      %s31 = ssub.s32 256, 256
      %32 = vsyncadd [#allocation6], %s31
      %s33 = sshll.u32 [#allocation5], 4
      %s34 = int_to_ptr.vmem [resolvable:$true] %s33
      %39 = dma.hbm_to_vmem [thread:$0]  %s1, 256, %s34, [#allocation6], 128, 128, 8
    $region9: #{tpu_custom_call.1} parent=1 // pred_fallthru
      _
    // Predicated region
    $region10: #{tpu_custom_call.1} parent=1 // pred_check
      _
    $region11: #{tpu_custom_call.1} parent=1 // pred_check_branch
      %41 = sbr.rel (0) target = $region13
    $region12: #{tpu_custom_call.1} parent=1 // pred_region
      %s43 = ssub.s32 2048, 2048
      %44 = vsyncadd [#allocation6], %s43
      %s45 = sshll.u32 [#allocation7], 4
      %s46 = int_to_ptr.vmem [resolvable:$true] %s45
      %51 = dma.hbm_to_vmem [thread:$0]  %s2, 2048, %s46, [#allocation6], 256, 256, 16
    $region13: #{tpu_custom_call.1} parent=1 // pred_fallthru
      _
    // Predicated region
    $region14: #{tpu_custom_call.1} parent=1 // pred_check
      _
    $region15: #{tpu_custom_call.1} parent=1 // pred_check_branch
      %53 = sbr.rel (0) target = $region17
    $region16: #{tpu_custom_call.1} parent=1 // pred_region
      %s55 = ssub.s32 2048, 2048
      %56 = vsyncadd [#allocation9], %s55
      %s57 = sshll.u32 [#allocation8], 4
      %s58 = int_to_ptr.vmem [resolvable:$true] %s57
      %63 = dma.hbm_to_vmem [thread:$0]  %s3, 2048, %s58, [#allocation9], 256, 256, 16
    $region17: #{tpu_custom_call.1} parent=1 // pred_fallthru
      _
    // Predicated region
    $region18: #{tpu_custom_call.1} parent=1 // pred_check
      _
    $region19: #{tpu_custom_call.1} parent=1 // pred_check_branch
      %65 = sbr.rel (0) target = $region21
    $region20: #{tpu_custom_call.1} parent=1 // pred_region
      _
    $region21: #{tpu_custom_call.1} parent=1 // pred_fallthru
      _
    // Predicated region
    $region22: #{tpu_custom_call.1} parent=1 // pred_check
      _
    $region23: #{tpu_custom_call.1} parent=1 // pred_check_branch
      %67 = sbr.rel (0) target = $region25
    $region24: #{tpu_custom_call.1} parent=1 // pred_region
      _
    $region25: #{tpu_custom_call.1} parent=1 // pred_fallthru
      _
    // Predicated region
    $region26: #{tpu_custom_call.1} parent=1 // pred_check
      _
    $region27: #{tpu_custom_call.1} parent=1 // pred_check_branch
      %69 = sbr.rel (0) target = $region29
    $region28: #{tpu_custom_call.1} parent=1 // pred_region
      _
    $region29: #{tpu_custom_call.1} parent=1 // pred_fallthru
      _
    // Predicated region
    $region30: #{tpu_custom_call.1} parent=1 // pred_check
      _
    $region31: #{tpu_custom_call.1} parent=1 // pred_check_branch
      %71 = sbr.rel (0) target = $region33
    $region32: #{tpu_custom_call.1} parent=1 // pred_region
      %72 = dma.done [#allocation3], 256
    $region33: #{tpu_custom_call.1} parent=1 // pred_fallthru
      _
    // Predicated region
    $region34: #{tpu_custom_call.1} parent=1 // pred_check
      _
    $region35: #{tpu_custom_call.1} parent=1 // pred_check_branch
      %74 = sbr.rel (0) target = $region37
    $region36: #{tpu_custom_call.1} parent=1 // pred_region
      %75 = dma.done [#allocation6], 256
    $region37: #{tpu_custom_call.1} parent=1 // pred_fallthru
      _
    // Predicated region
    $region38: #{tpu_custom_call.1} parent=1 // pred_check
      _
    $region39: #{tpu_custom_call.1} parent=1 // pred_check_branch
      %77 = sbr.rel (0) target = $region41
    $region40: #{tpu_custom_call.1} parent=1 // pred_region
      %78 = dma.done [#allocation6], 2048
    $region41: #{tpu_custom_call.1} parent=1 // pred_fallthru
      _
    // Predicated region
    $region42: #{tpu_custom_call.1} parent=1 // pred_check
      _
    $region43: #{tpu_custom_call.1} parent=1 // pred_check_branch
      %80 = sbr.rel (0) target = $region45
    $region44: #{tpu_custom_call.1} parent=1 // pred_region
      %81 = dma.done [#allocation9], 2048
    $region45: #{tpu_custom_call.1} parent=1 // pred_fallthru
      _
    %v82 = vld [vmem:[#allocation2] sm:$0xff]
    %v83 = vld [vmem:[#allocation2 + $0x8] sm:$0xff]
    %v84 = vld [vmem:[#allocation5] sm:$0xff]
    %v85 = vld [vmem:[#allocation5 + $0x8] sm:$0xff]
    %vm86 = vcmp.gt.f32.partialorder %v84, 0.5
    %vm87 = vcmp.gt.f32.partialorder %v85, 0.5
    %v88 = vld [vmem:[#allocation8] sm:$0xff]
    %v89 = vld [vmem:[#allocation8 + $0x8] sm:$0xff]
    %v90 = vld [vmem:[#allocation8 + $0x10] sm:$0xff]
    %v91 = vld [vmem:[#allocation8 + $0x18] sm:$0xff]
    %v92 = vld [vmem:[#allocation8 + $0x20] sm:$0xff]
    %v93 = vld [vmem:[#allocation8 + $0x28] sm:$0xff]
    %v94 = vld [vmem:[#allocation8 + $0x30] sm:$0xff]
    %v95 = vld [vmem:[#allocation8 + $0x38] sm:$0xff]
    %v96 = vld [vmem:[#allocation8 + $0x40] sm:$0xff]
    %v97 = vld [vmem:[#allocation8 + $0x48] sm:$0xff]
    %v98 = vld [vmem:[#allocation8 + $0x50] sm:$0xff]
    %v99 = vld [vmem:[#allocation8 + $0x58] sm:$0xff]
    %v100 = vld [vmem:[#allocation8 + $0x60] sm:$0xff]
    %v101 = vld [vmem:[#allocation8 + $0x68] sm:$0xff]
    %v102 = vld [vmem:[#allocation8 + $0x70] sm:$0xff]
    %v103 = vld [vmem:[#allocation8 + $0x78] sm:$0xff]
    %v104 = vld [vmem:[#allocation7] sm:$0xff]
    %v105 = vld [vmem:[#allocation7 + $0x8] sm:$0xff]
    %v106 = vld [vmem:[#allocation7 + $0x10] sm:$0xff]
    %v107 = vld [vmem:[#allocation7 + $0x18] sm:$0xff]
    %v108 = vld [vmem:[#allocation7 + $0x20] sm:$0xff]
    %v109 = vld [vmem:[#allocation7 + $0x28] sm:$0xff]
    %v110 = vld [vmem:[#allocation7 + $0x30] sm:$0xff]
    %v111 = vld [vmem:[#allocation7 + $0x38] sm:$0xff]
    %v112 = vld [vmem:[#allocation7 + $0x40] sm:$0xff]
    %v113 = vld [vmem:[#allocation7 + $0x48] sm:$0xff]
    %v114 = vld [vmem:[#allocation7 + $0x50] sm:$0xff]
    %v115 = vld [vmem:[#allocation7 + $0x58] sm:$0xff]
    %v116 = vld [vmem:[#allocation7 + $0x60] sm:$0xff]
    %v117 = vld [vmem:[#allocation7 + $0x68] sm:$0xff]
    %v118 = vld [vmem:[#allocation7 + $0x70] sm:$0xff]
    %v119 = vld [vmem:[#allocation7 + $0x78] sm:$0xff]
    %v120 = vld [vmem:[%s4] sm:$0x3]
    %v122 = vlaneseq
    %v123 = vshrl.u32 %v122, 7
    %v124 = vsub.s32 0, %v123
    %v125 = vrot.slane %v120, %v124
    %v126 = vlaneseq
    %v127 = vshrl.u32 %v126, 7
    %v128 = vsub.s32 1, %v127
    %v129 = vrot.slane %v120, %v128
    %vm132 = vcmask 523264
    %v134 = vsel %vm132, %v82, 0
    %v137 = vsel %vm132, %v83, 0
    %139 = vmatprep.subr.mxu0 %v105
    %140 = vmatpush1.msra.mxu0 %v104
    %141 = vmatprep.subr.mxu0 %v107
    %142 = vmatpush1.msra.mxu0 %v106
    %143 = vmatprep.subr.mxu0 %v109
    %144 = vmatpush1.msra.mxu0 %v108
    %145 = vmatprep.subr.mxu0 %v111
    %146 = vmatpush1.msra.mxu0 %v110
    %147 = vmatprep.subr.mxu0 %v113
    %148 = vmatpush1.msra.mxu0 %v112
    %149 = vmatprep.subr.mxu0 %v115
    %150 = vmatpush1.msra.mxu0 %v114
    %151 = vmatprep.subr.mxu0 %v117
    %152 = vmatpush1.msra.mxu0 %v116
    %153 = vmatprep.subr.mxu0 %v119
    %154 = vmatpush1.msra.mxu0 %v118
    %155 = vmatprep.subr.mxu0 0.0
    %156 = vmatpush1.msra.mxu0 0.0
    %157 = vmatprep.subr.mxu0 0.0
    %158 = vmatpush1.msra.mxu0 0.0
    %159 = vmatprep.subr.mxu0 0.0
    %160 = vmatpush1.msra.mxu0 0.0
    %161 = vmatprep.subr.mxu0 0.0
    %162 = vmatpush1.msra.mxu0 0.0
    %163 = vmatprep.subr.mxu0 0.0
    %164 = vmatpush1.msra.mxu0 0.0
    %165 = vmatprep.subr.mxu0 0.0
    %166 = vmatpush1.msra.mxu0 0.0
    %167 = vmatprep.subr.mxu0 0.0
    %168 = vmatpush1.msra.mxu0 0.0
    %169 = vmatprep.subr.mxu0 0.0
    %170 = vmatpush1.msra.mxu0 0.0
    %171 = vmatprep.subr.mxu0 0.0
    %172 = vmatpush1.msra.mxu0 0.0
    %173 = vmatprep.subr.mxu0 0.0
    %174 = vmatpush1.msra.mxu0 0.0
    %175 = vmatprep.subr.mxu0 0.0
    %176 = vmatpush1.msra.mxu0 0.0
    %177 = vmatprep.subr.mxu0 0.0
    %178 = vmatpush1.msra.mxu0 0.0
    %179 = vmatprep.subr.mxu0 0.0
    %180 = vmatpush1.msra.mxu0 0.0
    %181 = vmatprep.subr.mxu0 0.0
    %182 = vmatpush1.msra.mxu0 0.0
    %183 = vmatprep.subr.mxu0 0.0
    %184 = vmatpush1.msra.mxu0 0.0
    %185 = vmatprep.subr.mxu0 0.0
    %186 = vmatpush1.msra.mxu0 0.0
    %187 = vmatprep.subr.mxu0 0.0
    %188 = vmatpush1.msra.mxu0 0.0
    %189 = vmatprep.subr.mxu0 0.0
    %190 = vmatpush1.msra.mxu0 0.0
    %191 = vmatprep.subr.mxu0 0.0
    %192 = vmatpush1.msra.mxu0 0.0
    %193 = vmatprep.subr.mxu0 0.0
    %194 = vmatpush1.msra.mxu0 0.0
    %195 = vmatprep.subr.mxu0 0.0
    %196 = vmatpush1.msra.mxu0 0.0
    %197 = vmatprep.subr.mxu0 0.0
    %198 = vmatpush1.msra.mxu0 0.0
    %199 = vmatprep.subr.mxu0 0.0
    %200 = vmatpush1.msra.mxu0 0.0
    %201 = vmatprep.subr.mxu0 0.0
    %202 = vmatpush1.msra.mxu0 0.0
    %203 = vmatprep.mubr.f32.mxu0 0.0
    %204 = vmatmul.mubr.f32.gmra.mrb[0].mxu0 %v134
    %v205 = vpop.f32.mrb[0].mxu0
    %v206 = vadd.f32 %v125, %v205
    %v207 = vpop.f32.mrb[0].mxu0
    %v208 = vadd.f32 %v129, %v207
    %209 = vmatprep.mubr.f32.mxu0 0.0
    %210 = vmatmul.mubr.f32.gmra.mrb[0].mxu0 %v137
    %v211 = vpop.f32.mrb[0].mxu0
    %v212 = vadd.f32 %v125, %v211
    %v213 = vpop.f32.mrb[0].mxu0
    %v214 = vadd.f32 %v129, %v213
    %215 = vdwg.mxu0
    %v216 = vld [vmem:[%s5] sm:$0x1]
    %v218 = vlaneseq
    %v219 = vshrl.u32 %v218, 7
    %v220 = vsub.s32 0, %v219
    %v221 = vrot.slane %v216, %v220
    %v223 = vlaneseq
    %v224 = vand.u32 %v223, 127
    %v226 = vsel %vm132, 0.0, 0
    %228 = vmatprep.subr.mxu0 %v89
    %229 = vmatpush1.msra.mxu0 %v88
    %230 = vmatprep.subr.mxu0 %v91
    %231 = vmatpush1.msra.mxu0 %v90
    %232 = vmatprep.subr.mxu0 %v93
    %233 = vmatpush1.msra.mxu0 %v92
    %234 = vmatprep.subr.mxu0 %v95
    %235 = vmatpush1.msra.mxu0 %v94
    %236 = vmatprep.subr.mxu0 %v97
    %237 = vmatpush1.msra.mxu0 %v96
    %238 = vmatprep.subr.mxu0 %v99
    %239 = vmatpush1.msra.mxu0 %v98
    %240 = vmatprep.subr.mxu0 %v101
    %241 = vmatpush1.msra.mxu0 %v100
    %242 = vmatprep.subr.mxu0 %v103
    %243 = vmatpush1.msra.mxu0 %v102
    %244 = vmatprep.subr.mxu0 0.0
    %245 = vmatpush1.msra.mxu0 0.0
    %246 = vmatprep.subr.mxu0 0.0
    %247 = vmatpush1.msra.mxu0 0.0
    %248 = vmatprep.subr.mxu0 0.0
    %249 = vmatpush1.msra.mxu0 0.0
    %250 = vmatprep.subr.mxu0 0.0
    %251 = vmatpush1.msra.mxu0 0.0
    %252 = vmatprep.subr.mxu0 0.0
    %253 = vmatpush1.msra.mxu0 0.0
    %254 = vmatprep.subr.mxu0 0.0
    %255 = vmatpush1.msra.mxu0 0.0
    %256 = vmatprep.subr.mxu0 0.0
    %257 = vmatpush1.msra.mxu0 0.0
    %258 = vmatprep.subr.mxu0 0.0
    %259 = vmatpush1.msra.mxu0 0.0
    %260 = vmatprep.subr.mxu0 0.0
    %261 = vmatpush1.msra.mxu0 0.0
    %262 = vmatprep.subr.mxu0 0.0
    %263 = vmatpush1.msra.mxu0 0.0
    %264 = vmatprep.subr.mxu0 0.0
    %265 = vmatpush1.msra.mxu0 0.0
    %266 = vmatprep.subr.mxu0 0.0
    %267 = vmatpush1.msra.mxu0 0.0
    %268 = vmatprep.subr.mxu0 0.0
    %269 = vmatpush1.msra.mxu0 0.0
    %270 = vmatprep.subr.mxu0 0.0
    %271 = vmatpush1.msra.mxu0 0.0
    %272 = vmatprep.subr.mxu0 0.0
    %273 = vmatpush1.msra.mxu0 0.0
    %274 = vmatprep.subr.mxu0 0.0
    %275 = vmatpush1.msra.mxu0 0.0
    %276 = vmatprep.subr.mxu0 0.0
    %277 = vmatpush1.msra.mxu0 0.0
    %278 = vmatprep.subr.mxu0 0.0
    %279 = vmatpush1.msra.mxu0 0.0
    %280 = vmatprep.subr.mxu0 0.0
    %281 = vmatpush1.msra.mxu0 0.0
    %282 = vmatprep.subr.mxu0 0.0
    %283 = vmatpush1.msra.mxu0 0.0
    %284 = vmatprep.subr.mxu0 0.0
    %285 = vmatpush1.msra.mxu0 0.0
    %286 = vmatprep.subr.mxu0 0.0
    %287 = vmatpush1.msra.mxu0 0.0
    %288 = vmatprep.subr.mxu0 0.0
    %289 = vmatpush1.msra.mxu0 0.0
    %290 = vmatprep.subr.mxu0 0.0
    %291 = vmatpush1.msra.mxu0 0.0
    %292 = vmatprep.mubr.f32.mxu0 0.0
    %293 = vmatmul.mubr.f32.gmra.mrb[0].mxu0 %v226
    %v294 = vpop.f32.mrb[0].mxu0
    %v295 = vadd.f32 0.0, %v294
    %v296 = vpop.f32.mrb[0].mxu0
    %v297 = vadd.f32 0.0, %v296
    %298 = vdwg.mxu0
    %v299 = vadd.f32 %v206, %v295
    %v300 = vadd.f32 %v208, %v297
    %v301 = vtanh.pop %v299
    %v302 = vtanh.pop %v300
    %v303 = vmul.f32 %v301, 0.5
    %v304 = vadd.f32 %v303, 0.5
    %v305 = vmul.f32 %v302, 0.5
    %v306 = vadd.f32 %v305, 0.5
    %v307 = vmul.f32 %v304, 0.0
    %v308 = vmul.f32 %v304, %v302
    %310 = vrot.lane.b32.xlu0 %v308, 64
    %v311 = vpop.permute.xlu0 %310
    %v313 = vadd.f32 %v307, %v311
    %v314 = vtanh.pop %v313
    %v315 = vmul.f32 %v306, %v314
    %317 = vrot.lane.b32.xlu0 %v315, 64
    %v318 = vpop.permute.xlu0 %317
    %v320 = vsel %vm86, %v318, 0.0
    %322 = vrot.lane.b32.xlu0 %v313, 64
    %v323 = vpop.permute.xlu0 %322
    %v325 = vsel %vm86, %v323, 0.0
    %v326 = vmul.f32 %v320, %v221
    %vm327 = vcmask 254976
    %v328 = vsel %vm327, %v326, 0.0
    %329 = vadd.xlane.f32.xlu0 %v328
    %v330 = vpop.xlane.xlu0 %329
    %332 = vrot.lane.b32.xlu0 %v326, 96
    %v333 = vpop.permute.xlu0 %332
    %v335 = vsel %vm327, %v333, 0.0
    %336 = vadd.xlane.f32.xlu0 %v335
    %v337 = vpop.xlane.xlu0 %336
    %vm338 = vcmp.eq.s32.totalorder %v224, 0
    %v339 = vsel %vm338, 1, 0
    %v340 = vcvt.s32.f32 %v339
    %v341 = vmul.f32 %v330, %v340
    %v342 = vadd.f32 %v341, 0.0
    %vm343 = vcmp.eq.s32.totalorder %v224, 7
    %v344 = vsel %vm343, 1, 0
    %v345 = vcvt.s32.f32 %v344
    %v346 = vmul.f32 %v337, %v345
    %v347 = vadd.f32 %v342, %v346
    %v349 = vsel %vm132, %v320, 0
    %351 = vmatprep.subr.mxu0 %v89
    %352 = vmatpush1.msra.mxu0 %v88
    %353 = vmatprep.subr.mxu0 %v91
    %354 = vmatpush1.msra.mxu0 %v90
    %355 = vmatprep.subr.mxu0 %v93
    %356 = vmatpush1.msra.mxu0 %v92
    %357 = vmatprep.subr.mxu0 %v95
    %358 = vmatpush1.msra.mxu0 %v94
    %359 = vmatprep.subr.mxu0 %v97
    %360 = vmatpush1.msra.mxu0 %v96
    %361 = vmatprep.subr.mxu0 %v99
    %362 = vmatpush1.msra.mxu0 %v98
    %363 = vmatprep.subr.mxu0 %v101
    %364 = vmatpush1.msra.mxu0 %v100
    %365 = vmatprep.subr.mxu0 %v103
    %366 = vmatpush1.msra.mxu0 %v102
    %367 = vmatprep.subr.mxu0 0.0
    %368 = vmatpush1.msra.mxu0 0.0
    %369 = vmatprep.subr.mxu0 0.0
    %370 = vmatpush1.msra.mxu0 0.0
    %371 = vmatprep.subr.mxu0 0.0
    %372 = vmatpush1.msra.mxu0 0.0
    %373 = vmatprep.subr.mxu0 0.0
    %374 = vmatpush1.msra.mxu0 0.0
    %375 = vmatprep.subr.mxu0 0.0
    %376 = vmatpush1.msra.mxu0 0.0
    %377 = vmatprep.subr.mxu0 0.0
    %378 = vmatpush1.msra.mxu0 0.0
    %379 = vmatprep.subr.mxu0 0.0
    %380 = vmatpush1.msra.mxu0 0.0
    %381 = vmatprep.subr.mxu0 0.0
    %382 = vmatpush1.msra.mxu0 0.0
    %383 = vmatprep.subr.mxu0 0.0
    %384 = vmatpush1.msra.mxu0 0.0
    %385 = vmatprep.subr.mxu0 0.0
    %386 = vmatpush1.msra.mxu0 0.0
    %387 = vmatprep.subr.mxu0 0.0
    %388 = vmatpush1.msra.mxu0 0.0
    %389 = vmatprep.subr.mxu0 0.0
    %390 = vmatpush1.msra.mxu0 0.0
    %391 = vmatprep.subr.mxu0 0.0
    %392 = vmatpush1.msra.mxu0 0.0
    %393 = vmatprep.subr.mxu0 0.0
    %394 = vmatpush1.msra.mxu0 0.0
    %395 = vmatprep.subr.mxu0 0.0
    %396 = vmatpush1.msra.mxu0 0.0
    %397 = vmatprep.subr.mxu0 0.0
    %398 = vmatpush1.msra.mxu0 0.0
    %399 = vmatprep.subr.mxu0 0.0
    %400 = vmatpush1.msra.mxu0 0.0
    %401 = vmatprep.subr.mxu0 0.0
    %402 = vmatpush1.msra.mxu0 0.0
    %403 = vmatprep.subr.mxu0 0.0
    %404 = vmatpush1.msra.mxu0 0.0
    %405 = vmatprep.subr.mxu0 0.0
    %406 = vmatpush1.msra.mxu0 0.0
    %407 = vmatprep.subr.mxu0 0.0
    %408 = vmatpush1.msra.mxu0 0.0
    %409 = vmatprep.subr.mxu0 0.0
    %410 = vmatpush1.msra.mxu0 0.0
    %411 = vmatprep.subr.mxu0 0.0
    %412 = vmatpush1.msra.mxu0 0.0
    %413 = vmatprep.subr.mxu0 0.0
    %414 = vmatpush1.msra.mxu0 0.0
    %415 = vmatprep.mubr.f32.mxu0 0.0
    %416 = vmatmul.mubr.f32.gmra.mrb[0].mxu0 %v349
    %v417 = vpop.f32.mrb[0].mxu0
    %v418 = vadd.f32 0.0, %v417
    %v419 = vpop.f32.mrb[0].mxu0
    %v420 = vadd.f32 0.0, %v419
    %421 = vdwg.mxu0
    %v424 = vrot.slane %v418, 6
    %v425 = vrot.slane %v420, 6
    %v428 = vadd.f32 %v206, %v424
    %v429 = vadd.f32 %v208, %v425
    %v430 = vtanh.pop %v428
    %v431 = vtanh.pop %v429
    %v432 = vmul.f32 %v430, 0.5
    %v433 = vadd.f32 %v432, 0.5
    %v434 = vmul.f32 %v431, 0.5
    %v435 = vadd.f32 %v434, 0.5
    %v437 = vrot.slane %v325, 6
    %438 = vrot.lane.b32.xlu0 %v437, 64
    %v439 = vpop.permute.xlu0 %438
    %v441 = vmul.f32 %v433, %v439
    %v442 = vmul.f32 %v433, %v431
    %444 = vrot.lane.b32.xlu0 %v442, 64
    %v445 = vpop.permute.xlu0 %444
    %v447 = vadd.f32 %v441, %v445
    %v448 = vtanh.pop %v447
    %v449 = vmul.f32 %v435, %v448
    %451 = vrot.lane.b32.xlu0 %v449, 64
    %v452 = vpop.permute.xlu0 %451
    %v454 = vrot.slane %v320, 6
    %v456 = vsel %vm86, %v452, %v454
    %458 = vrot.lane.b32.xlu0 %v447, 64
    %v459 = vpop.permute.xlu0 %458
    %v462 = vsel %vm86, %v459, %v437
    %v463 = vmul.f32 %v456, %v221
    %vm464 = vcmask 257026
    %v465 = vsel %vm464, %v463, 0.0
    %466 = vadd.xlane.f32.xlu0 %v465
    %v467 = vpop.xlane.xlu0 %466
    %469 = vrot.lane.b32.xlu0 %v463, 96
    %v470 = vpop.permute.xlu0 %469
    %v472 = vsel %vm464, %v470, 0.0
    %473 = vadd.xlane.f32.xlu0 %v472
    %v474 = vpop.xlane.xlu0 %473
    %vm475 = vcmp.eq.s32.totalorder %v224, 1
    %v476 = vsel %vm475, 1, 0
    %v477 = vcvt.s32.f32 %v476
    %v478 = vmul.f32 %v467, %v477
    %v480 = vrot.slane %v478, 2
    %v482 = vadd.f32 %v347, %v480
    %vm483 = vcmp.eq.s32.totalorder %v224, 6
    %v484 = vsel %vm483, 1, 0
    %v485 = vcvt.s32.f32 %v484
    %v486 = vmul.f32 %v474, %v485
    %v488 = vrot.slane %v486, 2
    %v490 = vadd.f32 %v482, %v488
    %v492 = vrot.slane %v456, 2
    %v493 = vsel %vm132, %v492, 0
    %495 = vmatprep.subr.mxu0 %v89
    %496 = vmatpush1.msra.mxu0 %v88
    %497 = vmatprep.subr.mxu0 %v91
    %498 = vmatpush1.msra.mxu0 %v90
    %499 = vmatprep.subr.mxu0 %v93
    %500 = vmatpush1.msra.mxu0 %v92
    %501 = vmatprep.subr.mxu0 %v95
    %502 = vmatpush1.msra.mxu0 %v94
    %503 = vmatprep.subr.mxu0 %v97
    %504 = vmatpush1.msra.mxu0 %v96
    %505 = vmatprep.subr.mxu0 %v99
    %506 = vmatpush1.msra.mxu0 %v98
    %507 = vmatprep.subr.mxu0 %v101
    %508 = vmatpush1.msra.mxu0 %v100
    %509 = vmatprep.subr.mxu0 %v103
    %510 = vmatpush1.msra.mxu0 %v102
    %511 = vmatprep.subr.mxu0 0.0
    %512 = vmatpush1.msra.mxu0 0.0
    %513 = vmatprep.subr.mxu0 0.0
    %514 = vmatpush1.msra.mxu0 0.0
    %515 = vmatprep.subr.mxu0 0.0
    %516 = vmatpush1.msra.mxu0 0.0
    %517 = vmatprep.subr.mxu0 0.0
    %518 = vmatpush1.msra.mxu0 0.0
    %519 = vmatprep.subr.mxu0 0.0
    %520 = vmatpush1.msra.mxu0 0.0
    %521 = vmatprep.subr.mxu0 0.0
    %522 = vmatpush1.msra.mxu0 0.0
    %523 = vmatprep.subr.mxu0 0.0
    %524 = vmatpush1.msra.mxu0 0.0
    %525 = vmatprep.subr.mxu0 0.0
    %526 = vmatpush1.msra.mxu0 0.0
    %527 = vmatprep.subr.mxu0 0.0
    %528 = vmatpush1.msra.mxu0 0.0
    %529 = vmatprep.subr.mxu0 0.0
    %530 = vmatpush1.msra.mxu0 0.0
    %531 = vmatprep.subr.mxu0 0.0
    %532 = vmatpush1.msra.mxu0 0.0
    %533 = vmatprep.subr.mxu0 0.0
    %534 = vmatpush1.msra.mxu0 0.0
    %535 = vmatprep.subr.mxu0 0.0
    %536 = vmatpush1.msra.mxu0 0.0
    %537 = vmatprep.subr.mxu0 0.0
    %538 = vmatpush1.msra.mxu0 0.0
    %539 = vmatprep.subr.mxu0 0.0
    %540 = vmatpush1.msra.mxu0 0.0
    %541 = vmatprep.subr.mxu0 0.0
    %542 = vmatpush1.msra.mxu0 0.0
    %543 = vmatprep.subr.mxu0 0.0
    %544 = vmatpush1.msra.mxu0 0.0
    %545 = vmatprep.subr.mxu0 0.0
    %546 = vmatpush1.msra.mxu0 0.0
    %547 = vmatprep.subr.mxu0 0.0
    %548 = vmatpush1.msra.mxu0 0.0
    %549 = vmatprep.subr.mxu0 0.0
    %550 = vmatpush1.msra.mxu0 0.0
    %551 = vmatprep.subr.mxu0 0.0
    %552 = vmatpush1.msra.mxu0 0.0
    %553 = vmatprep.subr.mxu0 0.0
    %554 = vmatpush1.msra.mxu0 0.0
    %555 = vmatprep.subr.mxu0 0.0
    %556 = vmatpush1.msra.mxu0 0.0
    %557 = vmatprep.subr.mxu0 0.0
    %558 = vmatpush1.msra.mxu0 0.0
    %559 = vmatprep.mubr.f32.mxu0 0.0
    %560 = vmatmul.mubr.f32.gmra.mrb[0].mxu0 %v493
    %v561 = vpop.f32.mrb[0].mxu0
    %v562 = vadd.f32 0.0, %v561
    %v563 = vpop.f32.mrb[0].mxu0
    %v564 = vadd.f32 0.0, %v563
    %565 = vdwg.mxu0
    %v568 = vrot.slane %v562, 4
    %v569 = vrot.slane %v564, 4
    %v572 = vadd.f32 %v206, %v568
    %v573 = vadd.f32 %v208, %v569
    %v574 = vtanh.pop %v572
    %v575 = vtanh.pop %v573
    %v576 = vmul.f32 %v574, 0.5
    %v577 = vadd.f32 %v576, 0.5
    %v578 = vmul.f32 %v575, 0.5
    %v579 = vadd.f32 %v578, 0.5
    %v581 = vrot.slane %v462, 6
    %582 = vrot.lane.b32.xlu0 %v581, 64
    %v583 = vpop.permute.xlu0 %582
    %v585 = vmul.f32 %v577, %v583
    %v586 = vmul.f32 %v577, %v575
    %588 = vrot.lane.b32.xlu0 %v586, 64
    %v589 = vpop.permute.xlu0 %588
    %v591 = vadd.f32 %v585, %v589
    %v592 = vtanh.pop %v591
    %v593 = vmul.f32 %v579, %v592
    %595 = vrot.lane.b32.xlu0 %v593, 64
    %v596 = vpop.permute.xlu0 %595
    %v598 = vrot.slane %v456, 6
    %v600 = vsel %vm86, %v596, %v598
    %602 = vrot.lane.b32.xlu0 %v591, 64
    %v603 = vpop.permute.xlu0 %602
    %v606 = vsel %vm86, %v603, %v581
    %v607 = vmul.f32 %v600, %v221
    %vm608 = vcmask 259076
    %v609 = vsel %vm608, %v607, 0.0
    %610 = vadd.xlane.f32.xlu0 %v609
    %v611 = vpop.xlane.xlu0 %610
    %613 = vrot.lane.b32.xlu0 %v607, 96
    %v614 = vpop.permute.xlu0 %613
    %v616 = vsel %vm608, %v614, 0.0
    %617 = vadd.xlane.f32.xlu0 %v616
    %v618 = vpop.xlane.xlu0 %617
    %vm619 = vcmp.eq.s32.totalorder %v224, 2
    %v620 = vsel %vm619, 1, 0
    %v621 = vcvt.s32.f32 %v620
    %v622 = vmul.f32 %v611, %v621
    %v624 = vrot.slane %v622, 4
    %v626 = vadd.f32 %v490, %v624
    %vm627 = vcmp.eq.s32.totalorder %v224, 5
    %v628 = vsel %vm627, 1, 0
    %v629 = vcvt.s32.f32 %v628
    %v630 = vmul.f32 %v618, %v629
    %v632 = vrot.slane %v630, 4
    %v634 = vadd.f32 %v626, %v632
    %v636 = vrot.slane %v600, 4
    %v637 = vsel %vm132, %v636, 0
    %639 = vmatprep.subr.mxu0 %v89
    %640 = vmatpush1.msra.mxu0 %v88
    %641 = vmatprep.subr.mxu0 %v91
    %642 = vmatpush1.msra.mxu0 %v90
    %643 = vmatprep.subr.mxu0 %v93
    %644 = vmatpush1.msra.mxu0 %v92
    %645 = vmatprep.subr.mxu0 %v95
    %646 = vmatpush1.msra.mxu0 %v94
    %647 = vmatprep.subr.mxu0 %v97
    %648 = vmatpush1.msra.mxu0 %v96
    %649 = vmatprep.subr.mxu0 %v99
    %650 = vmatpush1.msra.mxu0 %v98
    %651 = vmatprep.subr.mxu0 %v101
    %652 = vmatpush1.msra.mxu0 %v100
    %653 = vmatprep.subr.mxu0 %v103
    %654 = vmatpush1.msra.mxu0 %v102
    %655 = vmatprep.subr.mxu0 0.0
    %656 = vmatpush1.msra.mxu0 0.0
    %657 = vmatprep.subr.mxu0 0.0
    %658 = vmatpush1.msra.mxu0 0.0
    %659 = vmatprep.subr.mxu0 0.0
    %660 = vmatpush1.msra.mxu0 0.0
    %661 = vmatprep.subr.mxu0 0.0
    %662 = vmatpush1.msra.mxu0 0.0
    %663 = vmatprep.subr.mxu0 0.0
    %664 = vmatpush1.msra.mxu0 0.0
    %665 = vmatprep.subr.mxu0 0.0
    %666 = vmatpush1.msra.mxu0 0.0
    %667 = vmatprep.subr.mxu0 0.0
    %668 = vmatpush1.msra.mxu0 0.0
    %669 = vmatprep.subr.mxu0 0.0
    %670 = vmatpush1.msra.mxu0 0.0
    %671 = vmatprep.subr.mxu0 0.0
    %672 = vmatpush1.msra.mxu0 0.0
    %673 = vmatprep.subr.mxu0 0.0
    %674 = vmatpush1.msra.mxu0 0.0
    %675 = vmatprep.subr.mxu0 0.0
    %676 = vmatpush1.msra.mxu0 0.0
    %677 = vmatprep.subr.mxu0 0.0
    %678 = vmatpush1.msra.mxu0 0.0
    %679 = vmatprep.subr.mxu0 0.0
    %680 = vmatpush1.msra.mxu0 0.0
    %681 = vmatprep.subr.mxu0 0.0
    %682 = vmatpush1.msra.mxu0 0.0
    %683 = vmatprep.subr.mxu0 0.0
    %684 = vmatpush1.msra.mxu0 0.0
    %685 = vmatprep.subr.mxu0 0.0
    %686 = vmatpush1.msra.mxu0 0.0
    %687 = vmatprep.subr.mxu0 0.0
    %688 = vmatpush1.msra.mxu0 0.0
    %689 = vmatprep.subr.mxu0 0.0
    %690 = vmatpush1.msra.mxu0 0.0
    %691 = vmatprep.subr.mxu0 0.0
    %692 = vmatpush1.msra.mxu0 0.0
    %693 = vmatprep.subr.mxu0 0.0
    %694 = vmatpush1.msra.mxu0 0.0
    %695 = vmatprep.subr.mxu0 0.0
    %696 = vmatpush1.msra.mxu0 0.0
    %697 = vmatprep.subr.mxu0 0.0
    %698 = vmatpush1.msra.mxu0 0.0
    %699 = vmatprep.subr.mxu0 0.0
    %700 = vmatpush1.msra.mxu0 0.0
    %701 = vmatprep.subr.mxu0 0.0
    %702 = vmatpush1.msra.mxu0 0.0
    %703 = vmatprep.mubr.f32.mxu0 0.0
    %704 = vmatmul.mubr.f32.gmra.mrb[0].mxu0 %v637
    %v705 = vpop.f32.mrb[0].mxu0
    %v706 = vadd.f32 0.0, %v705
    %v707 = vpop.f32.mrb[0].mxu0
    %v708 = vadd.f32 0.0, %v707
    %709 = vdwg.mxu0
    %v712 = vrot.slane %v706, 2
    %v713 = vrot.slane %v708, 2
    %v716 = vadd.f32 %v206, %v712
    %v717 = vadd.f32 %v208, %v713
    %v718 = vtanh.pop %v716
    %v719 = vtanh.pop %v717
    %v720 = vmul.f32 %v718, 0.5
    %v721 = vadd.f32 %v720, 0.5
    %v722 = vmul.f32 %v719, 0.5
    %v723 = vadd.f32 %v722, 0.5
    %v725 = vrot.slane %v606, 6
    %726 = vrot.lane.b32.xlu0 %v725, 64
    %v727 = vpop.permute.xlu0 %726
    %v729 = vmul.f32 %v721, %v727
    %v730 = vmul.f32 %v721, %v719
    %732 = vrot.lane.b32.xlu0 %v730, 64
    %v733 = vpop.permute.xlu0 %732
    %v735 = vadd.f32 %v729, %v733
    %v736 = vtanh.pop %v735
    %v737 = vmul.f32 %v723, %v736
    %739 = vrot.lane.b32.xlu0 %v737, 64
    %v740 = vpop.permute.xlu0 %739
    %v742 = vrot.slane %v600, 6
    %v744 = vsel %vm86, %v740, %v742
    %746 = vrot.lane.b32.xlu0 %v735, 64
    %v747 = vpop.permute.xlu0 %746
    %v750 = vsel %vm86, %v747, %v725
    %v751 = vmul.f32 %v744, %v221
    %vm752 = vcmask 261126
    %v753 = vsel %vm752, %v751, 0.0
    %754 = vadd.xlane.f32.xlu0 %v753
    %v755 = vpop.xlane.xlu0 %754
    %757 = vrot.lane.b32.xlu0 %v751, 96
    %v758 = vpop.permute.xlu0 %757
    %v760 = vsel %vm752, %v758, 0.0
    %761 = vadd.xlane.f32.xlu0 %v760
    %v762 = vpop.xlane.xlu0 %761
    %vm763 = vcmp.eq.s32.totalorder %v224, 3
    %v764 = vsel %vm763, 1, 0
    %v765 = vcvt.s32.f32 %v764
    %v766 = vmul.f32 %v755, %v765
    %v768 = vrot.slane %v766, 6
    %v770 = vadd.f32 %v634, %v768
    %vm771 = vcmp.eq.s32.totalorder %v224, 4
    %v772 = vsel %vm771, 1, 0
    %v773 = vcvt.s32.f32 %v772
    %v774 = vmul.f32 %v762, %v773
    %v776 = vrot.slane %v774, 6
    %v778 = vadd.f32 %v770, %v776
    %v780 = vrot.slane %v744, 6
    %v781 = vsel %vm132, %v780, 0
    %783 = vmatprep.subr.mxu0 %v89
    %784 = vmatpush1.msra.mxu0 %v88
    %785 = vmatprep.subr.mxu0 %v91
    %786 = vmatpush1.msra.mxu0 %v90
    %787 = vmatprep.subr.mxu0 %v93
    %788 = vmatpush1.msra.mxu0 %v92
    %789 = vmatprep.subr.mxu0 %v95
    %790 = vmatpush1.msra.mxu0 %v94
    %791 = vmatprep.subr.mxu0 %v97
    %792 = vmatpush1.msra.mxu0 %v96
    %793 = vmatprep.subr.mxu0 %v99
    %794 = vmatpush1.msra.mxu0 %v98
    %795 = vmatprep.subr.mxu0 %v101
    %796 = vmatpush1.msra.mxu0 %v100
    %797 = vmatprep.subr.mxu0 %v103
    %798 = vmatpush1.msra.mxu0 %v102
    %799 = vmatprep.subr.mxu0 0.0
    %800 = vmatpush1.msra.mxu0 0.0
    %801 = vmatprep.subr.mxu0 0.0
    %802 = vmatpush1.msra.mxu0 0.0
    %803 = vmatprep.subr.mxu0 0.0
    %804 = vmatpush1.msra.mxu0 0.0
    %805 = vmatprep.subr.mxu0 0.0
    %806 = vmatpush1.msra.mxu0 0.0
    %807 = vmatprep.subr.mxu0 0.0
    %808 = vmatpush1.msra.mxu0 0.0
    %809 = vmatprep.subr.mxu0 0.0
    %810 = vmatpush1.msra.mxu0 0.0
    %811 = vmatprep.subr.mxu0 0.0
    %812 = vmatpush1.msra.mxu0 0.0
    %813 = vmatprep.subr.mxu0 0.0
    %814 = vmatpush1.msra.mxu0 0.0
    %815 = vmatprep.subr.mxu0 0.0
    %816 = vmatpush1.msra.mxu0 0.0
    %817 = vmatprep.subr.mxu0 0.0
    %818 = vmatpush1.msra.mxu0 0.0
    %819 = vmatprep.subr.mxu0 0.0
    %820 = vmatpush1.msra.mxu0 0.0
    %821 = vmatprep.subr.mxu0 0.0
    %822 = vmatpush1.msra.mxu0 0.0
    %823 = vmatprep.subr.mxu0 0.0
    %824 = vmatpush1.msra.mxu0 0.0
    %825 = vmatprep.subr.mxu0 0.0
    %826 = vmatpush1.msra.mxu0 0.0
    %827 = vmatprep.subr.mxu0 0.0
    %828 = vmatpush1.msra.mxu0 0.0
    %829 = vmatprep.subr.mxu0 0.0
    %830 = vmatpush1.msra.mxu0 0.0
    %831 = vmatprep.subr.mxu0 0.0
    %832 = vmatpush1.msra.mxu0 0.0
    %833 = vmatprep.subr.mxu0 0.0
    %834 = vmatpush1.msra.mxu0 0.0
    %835 = vmatprep.subr.mxu0 0.0
    %836 = vmatpush1.msra.mxu0 0.0
    %837 = vmatprep.subr.mxu0 0.0
    %838 = vmatpush1.msra.mxu0 0.0
    %839 = vmatprep.subr.mxu0 0.0
    %840 = vmatpush1.msra.mxu0 0.0
    %841 = vmatprep.subr.mxu0 0.0
    %842 = vmatpush1.msra.mxu0 0.0
    %843 = vmatprep.subr.mxu0 0.0
    %844 = vmatpush1.msra.mxu0 0.0
    %845 = vmatprep.subr.mxu0 0.0
    %846 = vmatpush1.msra.mxu0 0.0
    %847 = vmatprep.mubr.f32.mxu0 0.0
    %848 = vmatmul.mubr.f32.gmra.mrb[0].mxu0 %v781
    %v849 = vpop.f32.mrb[0].mxu0
    %v850 = vadd.f32 0.0, %v849
    %v851 = vpop.f32.mrb[0].mxu0
    %v852 = vadd.f32 0.0, %v851
    %853 = vdwg.mxu0
    %v854 = vadd.f32 %v212, %v850
    %v855 = vadd.f32 %v214, %v852
    %v856 = vtanh.pop %v854
    %v857 = vtanh.pop %v855
    %v858 = vmul.f32 %v856, 0.5
    %v859 = vadd.f32 %v858, 0.5
    %v860 = vmul.f32 %v857, 0.5
    %v861 = vadd.f32 %v860, 0.5
    %v863 = vrot.slane %v750, 6
    %864 = vrot.lane.b32.xlu0 %v863, 64
    %v865 = vpop.permute.xlu0 %864
    %v867 = vmul.f32 %v859, %v865
    %v868 = vmul.f32 %v859, %v857
    %870 = vrot.lane.b32.xlu0 %v868, 64
    %v871 = vpop.permute.xlu0 %870
    %v873 = vadd.f32 %v867, %v871
    %v874 = vtanh.pop %v873
    %v875 = vmul.f32 %v861, %v874
    %877 = vrot.lane.b32.xlu0 %v875, 64
    %v878 = vpop.permute.xlu0 %877
    %v881 = vsel %vm87, %v878, %v780
    %883 = vrot.lane.b32.xlu0 %v873, 64
    %v884 = vpop.permute.xlu0 %883
    %v887 = vsel %vm87, %v884, %v863
    %v888 = vmul.f32 %v881, %v221
    %v889 = vsel %vm327, %v888, 0.0
    %890 = vadd.xlane.f32.xlu0 %v889
    %v891 = vpop.xlane.xlu0 %890
    %893 = vrot.lane.b32.xlu0 %v888, 96
    %v894 = vpop.permute.xlu0 %893
    %v896 = vsel %vm327, %v894, 0.0
    %897 = vadd.xlane.f32.xlu0 %v896
    %v898 = vpop.xlane.xlu0 %897
    %v899 = vmul.f32 %v891, %v773
    %v900 = vadd.f32 %v778, %v899
    %v901 = vmul.f32 %v898, %v765
    %v902 = vadd.f32 %v900, %v901
    %v904 = vsel %vm132, %v881, 0
    %906 = vmatprep.subr.mxu0 %v89
    %907 = vmatpush1.msra.mxu0 %v88
    %908 = vmatprep.subr.mxu0 %v91
    %909 = vmatpush1.msra.mxu0 %v90
    %910 = vmatprep.subr.mxu0 %v93
    %911 = vmatpush1.msra.mxu0 %v92
    %912 = vmatprep.subr.mxu0 %v95
    %913 = vmatpush1.msra.mxu0 %v94
    %914 = vmatprep.subr.mxu0 %v97
    %915 = vmatpush1.msra.mxu0 %v96
    %916 = vmatprep.subr.mxu0 %v99
    %917 = vmatpush1.msra.mxu0 %v98
    %918 = vmatprep.subr.mxu0 %v101
    %919 = vmatpush1.msra.mxu0 %v100
    %920 = vmatprep.subr.mxu0 %v103
    %921 = vmatpush1.msra.mxu0 %v102
    %922 = vmatprep.subr.mxu0 0.0
    %923 = vmatpush1.msra.mxu0 0.0
    %924 = vmatprep.subr.mxu0 0.0
    %925 = vmatpush1.msra.mxu0 0.0
    %926 = vmatprep.subr.mxu0 0.0
    %927 = vmatpush1.msra.mxu0 0.0
    %928 = vmatprep.subr.mxu0 0.0
    %929 = vmatpush1.msra.mxu0 0.0
    %930 = vmatprep.subr.mxu0 0.0
    %931 = vmatpush1.msra.mxu0 0.0
    %932 = vmatprep.subr.mxu0 0.0
    %933 = vmatpush1.msra.mxu0 0.0
    %934 = vmatprep.subr.mxu0 0.0
    %935 = vmatpush1.msra.mxu0 0.0
    %936 = vmatprep.subr.mxu0 0.0
    %937 = vmatpush1.msra.mxu0 0.0
    %938 = vmatprep.subr.mxu0 0.0
    %939 = vmatpush1.msra.mxu0 0.0
    %940 = vmatprep.subr.mxu0 0.0
    %941 = vmatpush1.msra.mxu0 0.0
    %942 = vmatprep.subr.mxu0 0.0
    %943 = vmatpush1.msra.mxu0 0.0
    %944 = vmatprep.subr.mxu0 0.0
    %945 = vmatpush1.msra.mxu0 0.0
    %946 = vmatprep.subr.mxu0 0.0
    %947 = vmatpush1.msra.mxu0 0.0
    %948 = vmatprep.subr.mxu0 0.0
    %949 = vmatpush1.msra.mxu0 0.0
    %950 = vmatprep.subr.mxu0 0.0
    %951 = vmatpush1.msra.mxu0 0.0
    %952 = vmatprep.subr.mxu0 0.0
    %953 = vmatpush1.msra.mxu0 0.0
    %954 = vmatprep.subr.mxu0 0.0
    %955 = vmatpush1.msra.mxu0 0.0
    %956 = vmatprep.subr.mxu0 0.0
    %957 = vmatpush1.msra.mxu0 0.0
    %958 = vmatprep.subr.mxu0 0.0
    %959 = vmatpush1.msra.mxu0 0.0
    %960 = vmatprep.subr.mxu0 0.0
    %961 = vmatpush1.msra.mxu0 0.0
    %962 = vmatprep.subr.mxu0 0.0
    %963 = vmatpush1.msra.mxu0 0.0
    %964 = vmatprep.subr.mxu0 0.0
    %965 = vmatpush1.msra.mxu0 0.0
    %966 = vmatprep.subr.mxu0 0.0
    %967 = vmatpush1.msra.mxu0 0.0
    %968 = vmatprep.subr.mxu0 0.0
    %969 = vmatpush1.msra.mxu0 0.0
    %970 = vmatprep.mubr.f32.mxu0 0.0
    %971 = vmatmul.mubr.f32.gmra.mrb[0].mxu0 %v904
    %v972 = vpop.f32.mrb[0].mxu0
    %v973 = vadd.f32 0.0, %v972
    %v974 = vpop.f32.mrb[0].mxu0
    %v975 = vadd.f32 0.0, %v974
    %976 = vdwg.mxu0
    %v979 = vrot.slane %v973, 6
    %v980 = vrot.slane %v975, 6
    %v983 = vadd.f32 %v212, %v979
    %v984 = vadd.f32 %v214, %v980
    %v985 = vtanh.pop %v983
    %v986 = vtanh.pop %v984
    %v987 = vmul.f32 %v985, 0.5
    %v988 = vadd.f32 %v987, 0.5
    %v989 = vmul.f32 %v986, 0.5
    %v990 = vadd.f32 %v989, 0.5
    %v992 = vrot.slane %v887, 6
    %993 = vrot.lane.b32.xlu0 %v992, 64
    %v994 = vpop.permute.xlu0 %993
    %v996 = vmul.f32 %v988, %v994
    %v997 = vmul.f32 %v988, %v986
    %999 = vrot.lane.b32.xlu0 %v997, 64
    %v1000 = vpop.permute.xlu0 %999
    %v1002 = vadd.f32 %v996, %v1000
    %v1003 = vtanh.pop %v1002
    %v1004 = vmul.f32 %v990, %v1003
    %1006 = vrot.lane.b32.xlu0 %v1004, 64
    %v1007 = vpop.permute.xlu0 %1006
    %v1009 = vrot.slane %v881, 6
    %v1011 = vsel %vm87, %v1007, %v1009
    %1013 = vrot.lane.b32.xlu0 %v1002, 64
    %v1014 = vpop.permute.xlu0 %1013
    %v1017 = vsel %vm87, %v1014, %v992
    %v1018 = vmul.f32 %v1011, %v221
    %v1019 = vsel %vm464, %v1018, 0.0
    %1020 = vadd.xlane.f32.xlu0 %v1019
    %v1021 = vpop.xlane.xlu0 %1020
    %1023 = vrot.lane.b32.xlu0 %v1018, 96
    %v1024 = vpop.permute.xlu0 %1023
    %v1026 = vsel %vm464, %v1024, 0.0
    %1027 = vadd.xlane.f32.xlu0 %v1026
    %v1028 = vpop.xlane.xlu0 %1027
    %v1029 = vmul.f32 %v1021, %v629
    %v1031 = vrot.slane %v1029, 2
    %v1033 = vadd.f32 %v902, %v1031
    %v1034 = vmul.f32 %v1028, %v621
    %v1036 = vrot.slane %v1034, 2
    %v1038 = vadd.f32 %v1033, %v1036
    %v1040 = vrot.slane %v1011, 2
    %v1041 = vsel %vm132, %v1040, 0
    %1043 = vmatprep.subr.mxu0 %v89
    %1044 = vmatpush1.msra.mxu0 %v88
    %1045 = vmatprep.subr.mxu0 %v91
    %1046 = vmatpush1.msra.mxu0 %v90
    %1047 = vmatprep.subr.mxu0 %v93
    %1048 = vmatpush1.msra.mxu0 %v92
    %1049 = vmatprep.subr.mxu0 %v95
    %1050 = vmatpush1.msra.mxu0 %v94
    %1051 = vmatprep.subr.mxu0 %v97
    %1052 = vmatpush1.msra.mxu0 %v96
    %1053 = vmatprep.subr.mxu0 %v99
    %1054 = vmatpush1.msra.mxu0 %v98
    %1055 = vmatprep.subr.mxu0 %v101
    %1056 = vmatpush1.msra.mxu0 %v100
    %1057 = vmatprep.subr.mxu0 %v103
    %1058 = vmatpush1.msra.mxu0 %v102
    %1059 = vmatprep.subr.mxu0 0.0
    %1060 = vmatpush1.msra.mxu0 0.0
    %1061 = vmatprep.subr.mxu0 0.0
    %1062 = vmatpush1.msra.mxu0 0.0
    %1063 = vmatprep.subr.mxu0 0.0
    %1064 = vmatpush1.msra.mxu0 0.0
    %1065 = vmatprep.subr.mxu0 0.0
    %1066 = vmatpush1.msra.mxu0 0.0
    %1067 = vmatprep.subr.mxu0 0.0
    %1068 = vmatpush1.msra.mxu0 0.0
    %1069 = vmatprep.subr.mxu0 0.0
    %1070 = vmatpush1.msra.mxu0 0.0
    %1071 = vmatprep.subr.mxu0 0.0
    %1072 = vmatpush1.msra.mxu0 0.0
    %1073 = vmatprep.subr.mxu0 0.0
    %1074 = vmatpush1.msra.mxu0 0.0
    %1075 = vmatprep.subr.mxu0 0.0
    %1076 = vmatpush1.msra.mxu0 0.0
    %1077 = vmatprep.subr.mxu0 0.0
    %1078 = vmatpush1.msra.mxu0 0.0
    %1079 = vmatprep.subr.mxu0 0.0
    %1080 = vmatpush1.msra.mxu0 0.0
    %1081 = vmatprep.subr.mxu0 0.0
    %1082 = vmatpush1.msra.mxu0 0.0
    %1083 = vmatprep.subr.mxu0 0.0
    %1084 = vmatpush1.msra.mxu0 0.0
    %1085 = vmatprep.subr.mxu0 0.0
    %1086 = vmatpush1.msra.mxu0 0.0
    %1087 = vmatprep.subr.mxu0 0.0
    %1088 = vmatpush1.msra.mxu0 0.0
    %1089 = vmatprep.subr.mxu0 0.0
    %1090 = vmatpush1.msra.mxu0 0.0
    %1091 = vmatprep.subr.mxu0 0.0
    %1092 = vmatpush1.msra.mxu0 0.0
    %1093 = vmatprep.subr.mxu0 0.0
    %1094 = vmatpush1.msra.mxu0 0.0
    %1095 = vmatprep.subr.mxu0 0.0
    %1096 = vmatpush1.msra.mxu0 0.0
    %1097 = vmatprep.subr.mxu0 0.0
    %1098 = vmatpush1.msra.mxu0 0.0
    %1099 = vmatprep.subr.mxu0 0.0
    %1100 = vmatpush1.msra.mxu0 0.0
    %1101 = vmatprep.subr.mxu0 0.0
    %1102 = vmatpush1.msra.mxu0 0.0
    %1103 = vmatprep.subr.mxu0 0.0
    %1104 = vmatpush1.msra.mxu0 0.0
    %1105 = vmatprep.subr.mxu0 0.0
    %1106 = vmatpush1.msra.mxu0 0.0
    %1107 = vmatprep.mubr.f32.mxu0 0.0
    %1108 = vmatmul.mubr.f32.gmra.mrb[0].mxu0 %v1041
    %v1109 = vpop.f32.mrb[0].mxu0
    %v1110 = vadd.f32 0.0, %v1109
    %v1111 = vpop.f32.mrb[0].mxu0
    %v1112 = vadd.f32 0.0, %v1111
    %1113 = vdwg.mxu0
    %v1116 = vrot.slane %v1110, 4
    %v1117 = vrot.slane %v1112, 4
    %v1120 = vadd.f32 %v212, %v1116
    %v1121 = vadd.f32 %v214, %v1117
    %v1122 = vtanh.pop %v1120
    %v1123 = vtanh.pop %v1121
    %v1124 = vmul.f32 %v1122, 0.5
    %v1125 = vadd.f32 %v1124, 0.5
    %v1126 = vmul.f32 %v1123, 0.5
    %v1127 = vadd.f32 %v1126, 0.5
    %v1129 = vrot.slane %v1017, 6
    %1130 = vrot.lane.b32.xlu0 %v1129, 64
    %v1131 = vpop.permute.xlu0 %1130
    %v1133 = vmul.f32 %v1125, %v1131
    %v1134 = vmul.f32 %v1125, %v1123
    %1136 = vrot.lane.b32.xlu0 %v1134, 64
    %v1137 = vpop.permute.xlu0 %1136
    %v1139 = vadd.f32 %v1133, %v1137
    %v1140 = vtanh.pop %v1139
    %v1141 = vmul.f32 %v1127, %v1140
    %1143 = vrot.lane.b32.xlu0 %v1141, 64
    %v1144 = vpop.permute.xlu0 %1143
    %v1146 = vrot.slane %v1011, 6
    %v1148 = vsel %vm87, %v1144, %v1146
    %1150 = vrot.lane.b32.xlu0 %v1139, 64
    %v1151 = vpop.permute.xlu0 %1150
    %v1154 = vsel %vm87, %v1151, %v1129
    %v1155 = vmul.f32 %v1148, %v221
    %v1156 = vsel %vm608, %v1155, 0.0
    %1157 = vadd.xlane.f32.xlu0 %v1156
    %v1158 = vpop.xlane.xlu0 %1157
    %1160 = vrot.lane.b32.xlu0 %v1155, 96
    %v1161 = vpop.permute.xlu0 %1160
    %v1163 = vsel %vm608, %v1161, 0.0
    %1164 = vadd.xlane.f32.xlu0 %v1163
    %v1165 = vpop.xlane.xlu0 %1164
    %v1166 = vmul.f32 %v1158, %v485
    %v1168 = vrot.slane %v1166, 4
    %v1170 = vadd.f32 %v1038, %v1168
    %v1171 = vmul.f32 %v1165, %v477
    %v1173 = vrot.slane %v1171, 4
    %v1175 = vadd.f32 %v1170, %v1173
    %v1177 = vrot.slane %v1148, 4
    %v1178 = vsel %vm132, %v1177, 0
    %1180 = vmatprep.subr.mxu0 %v89
    %1181 = vmatpush1.msra.mxu0 %v88
    %1182 = vmatprep.subr.mxu0 %v91
    %1183 = vmatpush1.msra.mxu0 %v90
    %1184 = vmatprep.subr.mxu0 %v93
    %1185 = vmatpush1.msra.mxu0 %v92
    %1186 = vmatprep.subr.mxu0 %v95
    %1187 = vmatpush1.msra.mxu0 %v94
    %1188 = vmatprep.subr.mxu0 %v97
    %1189 = vmatpush1.msra.mxu0 %v96
    %1190 = vmatprep.subr.mxu0 %v99
    %1191 = vmatpush1.msra.mxu0 %v98
    %1192 = vmatprep.subr.mxu0 %v101
    %1193 = vmatpush1.msra.mxu0 %v100
    %1194 = vmatprep.subr.mxu0 %v103
    %1195 = vmatpush1.msra.mxu0 %v102
    %1196 = vmatprep.subr.mxu0 0.0
    %1197 = vmatpush1.msra.mxu0 0.0
    %1198 = vmatprep.subr.mxu0 0.0
    %1199 = vmatpush1.msra.mxu0 0.0
    %1200 = vmatprep.subr.mxu0 0.0
    %1201 = vmatpush1.msra.mxu0 0.0
    %1202 = vmatprep.subr.mxu0 0.0
    %1203 = vmatpush1.msra.mxu0 0.0
    %1204 = vmatprep.subr.mxu0 0.0
    %1205 = vmatpush1.msra.mxu0 0.0
    %1206 = vmatprep.subr.mxu0 0.0
    %1207 = vmatpush1.msra.mxu0 0.0
    %1208 = vmatprep.subr.mxu0 0.0
    %1209 = vmatpush1.msra.mxu0 0.0
    %1210 = vmatprep.subr.mxu0 0.0
    %1211 = vmatpush1.msra.mxu0 0.0
    %1212 = vmatprep.subr.mxu0 0.0
    %1213 = vmatpush1.msra.mxu0 0.0
    %1214 = vmatprep.subr.mxu0 0.0
    %1215 = vmatpush1.msra.mxu0 0.0
    %1216 = vmatprep.subr.mxu0 0.0
    %1217 = vmatpush1.msra.mxu0 0.0
    %1218 = vmatprep.subr.mxu0 0.0
    %1219 = vmatpush1.msra.mxu0 0.0
    %1220 = vmatprep.subr.mxu0 0.0
    %1221 = vmatpush1.msra.mxu0 0.0
    %1222 = vmatprep.subr.mxu0 0.0
    %1223 = vmatpush1.msra.mxu0 0.0
    %1224 = vmatprep.subr.mxu0 0.0
    %1225 = vmatpush1.msra.mxu0 0.0
    %1226 = vmatprep.subr.mxu0 0.0
    %1227 = vmatpush1.msra.mxu0 0.0
    %1228 = vmatprep.subr.mxu0 0.0
    %1229 = vmatpush1.msra.mxu0 0.0
    %1230 = vmatprep.subr.mxu0 0.0
    %1231 = vmatpush1.msra.mxu0 0.0
    %1232 = vmatprep.subr.mxu0 0.0
    %1233 = vmatpush1.msra.mxu0 0.0
    %1234 = vmatprep.subr.mxu0 0.0
    %1235 = vmatpush1.msra.mxu0 0.0
    %1236 = vmatprep.subr.mxu0 0.0
    %1237 = vmatpush1.msra.mxu0 0.0
    %1238 = vmatprep.subr.mxu0 0.0
    %1239 = vmatpush1.msra.mxu0 0.0
    %1240 = vmatprep.subr.mxu0 0.0
    %1241 = vmatpush1.msra.mxu0 0.0
    %1242 = vmatprep.subr.mxu0 0.0
    %1243 = vmatpush1.msra.mxu0 0.0
    %1244 = vmatprep.mubr.f32.mxu0 0.0
    %1245 = vmatmul.mubr.f32.gmra.mrb[0].mxu0 %v1178
    %v1246 = vpop.f32.mrb[0].mxu0
    %v1247 = vadd.f32 0.0, %v1246
    %v1248 = vpop.f32.mrb[0].mxu0
    %v1249 = vadd.f32 0.0, %v1248
    %1250 = vdwg.mxu0
    %v1253 = vrot.slane %v1247, 2
    %v1254 = vrot.slane %v1249, 2
    %v1257 = vadd.f32 %v212, %v1253
    %v1258 = vadd.f32 %v214, %v1254
    %v1259 = vtanh.pop %v1257
    %v1260 = vtanh.pop %v1258
    %v1261 = vmul.f32 %v1259, 0.5
    %v1262 = vadd.f32 %v1261, 0.5
    %v1263 = vmul.f32 %v1260, 0.5
    %v1264 = vadd.f32 %v1263, 0.5
    %v1266 = vrot.slane %v1154, 6
    %1267 = vrot.lane.b32.xlu0 %v1266, 64
    %v1268 = vpop.permute.xlu0 %1267
    %v1270 = vmul.f32 %v1262, %v1268
    %v1271 = vmul.f32 %v1262, %v1260
    %1273 = vrot.lane.b32.xlu0 %v1271, 64
    %v1274 = vpop.permute.xlu0 %1273
    %v1276 = vadd.f32 %v1270, %v1274
    %v1277 = vtanh.pop %v1276
    %v1278 = vmul.f32 %v1264, %v1277
    %1280 = vrot.lane.b32.xlu0 %v1278, 64
    %v1281 = vpop.permute.xlu0 %1280
    %v1283 = vrot.slane %v1148, 6
    %v1285 = vsel %vm87, %v1281, %v1283
    %v1286 = vmul.f32 %v1285, %v221
    %v1287 = vsel %vm752, %v1286, 0.0
    %1288 = vadd.xlane.f32.xlu0 %v1287
    %v1289 = vpop.xlane.xlu0 %1288
    %1291 = vrot.lane.b32.xlu0 %v1286, 96
    %v1292 = vpop.permute.xlu0 %1291
    %v1294 = vsel %vm752, %v1292, 0.0
    %1295 = vadd.xlane.f32.xlu0 %v1294
    %v1296 = vpop.xlane.xlu0 %1295
    %v1297 = vmul.f32 %v1289, %v345
    %v1299 = vrot.slane %v1297, 6
    %v1301 = vadd.f32 %v1175, %v1299
    %v1302 = vmul.f32 %v1296, %v340
    %v1304 = vrot.slane %v1302, 6
    %v1306 = vadd.f32 %v1301, %v1304
    %v1307 = vld [vmem:[%s6] sm:$0x1]
    %v1309 = vlaneseq
    %v1310 = vshrl.u32 %v1309, 7
    %v1311 = vsub.s32 0, %v1310
    %v1312 = vrot.slane %v1307, %v1311
    %v1314 = vadd.f32 %v1306, %v1312
    %vm1315 = vcmp.gt.f32.partialorder %v1314, 0.0
    %v1316 = vsel %vm1315, 1, 0
    %vm1317 = vcmask 58368
    %1318 = vst.msk [vmem:[#allocation10] sm:$0x3] %vm1317, %v1316
    // Predicated region
    $region46: #{tpu_custom_call.1} parent=1 // pred_check
      _
    $region47: #{tpu_custom_call.1} parent=1 // pred_check_branch
      %1320 = sbr.rel (0) target = $region49
    $region48: #{tpu_custom_call.1} parent=1 // pred_region
      %s1322 = ssub.s32 32, 32
      %1323 = vsyncadd [#allocation4], %s1322
      %s1325 = sshll.u32 [#allocation10], 4
      %s1326 = int_to_ptr.vmem [resolvable:$true] %s1325
      %1328 = dma.vmem_to_hbm [thread:$0]  %s1326, 32, %s7, [#allocation4]
    $region49: #{tpu_custom_call.1} parent=1 // pred_fallthru
      _
    // Predicated region
    $region50: #{tpu_custom_call.1} parent=1 // pred_check
      _
    $region51: #{tpu_custom_call.1} parent=1 // pred_check_branch
      %1330 = sbr.rel (0) target = $region53
    $region52: #{tpu_custom_call.1} parent=1 // pred_region
      %1331 = dma.done [#allocation4], 32
    $region53: #{tpu_custom_call.1} parent=1 // pred_fallthru
      _
    %1332 = vsyncpa [#allocation3], 1
    %1333 = vsyncpa [#allocation6], 1
    %1334 = vsyncpa [#allocation9], 1
    %1335 = vsyncpa [#allocation4], 1

</llo_original>
